<compile_context>
chip_gen: v7x
topology: tpu7x:2x2x1
jax: 0.10.0
libtpu: 0.0.40
codegen_flags: <defaults>
</compile_context>

<pallas_src>
import jax
import jax.numpy as jnp
from jax import lax
from jax.experimental import pallas as pl
from jax.experimental.pallas import tpu as pltpu


def _round_up(x, m):
    return ((x + m - 1) // m) * m


def gru_encoder_kernel(ids_ref, len_ref, table_ref, whh_ref, bhn_ref,
                       wout_ref, bout_ref, out_ref, gi_ref):
    """Per-program (one batch tile) shapes:
       ids_ref  : (nbt*T*BT,) i32 SMEM  token ids, tile-major / time-major
       len_ref  : (BT, 1)     i32       true lengths (0 for padded rows)
       table_ref: (Vp, 3*Hp)  f32       emb @ W_ih^T + merged biases,
                                        gate blocks 128-lane aligned
       whh_ref  : (Hp, 3*Hp)  bf16      hidden->gate weights
       bhn_ref  : (1, Hp)     f32       b_hn (stays inside the r* term)
       wout_ref : (Hp, Op)    bf16      linear head weights
       bout_ref : (1, Op)     f32       linear head bias
       out_ref  : (BT, Op)    f32
       gi_ref   : (T*BT, 3*Hp) f32      scratch: gathered input-side pre-acts
    """
    BT = len_ref.shape[0]
    Hp = bhn_ref.shape[1]
    nrows = gi_ref.shape[0]
    T = nrows // BT

    # ---- Phase 1: fused embedding lookup == gather of precomputed rows. ----
    base = pl.program_id(0) * nrows

    @pl.loop(0, nrows)
    def _(r):
        tok = ids_ref[base + r]
        gi_ref[pl.ds(r, 1), :] = table_ref[pl.ds(tok, 1), :]

    # ---- Phase 2: GRU recurrence (hoist small invariants; W_hh reloaded ----
    # ---- from VMEM per step to keep vreg pressure low under the unroll). ---
    b_hn = jnp.broadcast_to(bhn_ref[...], (BT, Hp))       # (BT, Hp) f32
    lens = len_ref[...]                                    # (BT, 1)  i32

    def step(t, h):
        row = pl.multiple_of(t * BT, BT)
        gi = gi_ref[pl.ds(row, BT), :]                     # (BT, 3Hp) f32
        gh = jnp.dot(h.astype(jnp.bfloat16), whh_ref[...],
                     preferred_element_type=jnp.float32)   # bf16 MXU, f32 acc
        # Gate blocks are 128-lane aligned -> free slices.
        r = jax.nn.sigmoid(gi[:, 0:Hp] + gh[:, 0:Hp])
        z = jax.nn.sigmoid(gi[:, Hp:2 * Hp] + gh[:, Hp:2 * Hp])
        n = jnp.tanh(gi[:, 2 * Hp:3 * Hp] + r * (gh[:, 2 * Hp:3 * Hp] + b_hn))
        h_new = n + z * (h - n)
        # Packed-sequence semantics: freeze h once t >= length[b].
        return jnp.where(lens > t, h_new, h)

    h = lax.fori_loop(0, T, step, jnp.zeros((BT, Hp), jnp.float32),
                      unroll=min(T, 8))

    # ---- Phase 3: bio_scoring(hidden[-1]) linear head (lane-dense store). --
    out_ref[...] = (jnp.dot(h.astype(jnp.bfloat16), wout_ref[...],
                            preferred_element_type=jnp.float32)
                    + bout_ref[...])


def prepare_packed_params(params):
    """One-time packing of PyTorch-layout GRU params into kernel layout."""
    emb = params["emb"]                                  # (V, D) f32
    w_ih, w_hh = params["w_ih"], params["w_hh"]          # (3H, D), (3H, H)
    b_ih, b_hh = params["b_ih"], params["b_hh"]          # (3H,), (3H,)
    w_out, b_out = params["w_out"], params["b_out"]      # (O, H), (O,)

    V, _ = emb.shape
    H = w_hh.shape[1]
    O = w_out.shape[0]
    Hp = _round_up(H, 128)                               # lane-aligned gates
    Op = _round_up(O, 128)                               # lane-dense output
    Vp = _round_up(V, 8)                                 # sublane-aligned table

    # Fused embedding->gate table: emb[v] @ W_ih^T plus merged input biases
    # (b_ih + b_hh for r/z; only b_in for n — b_hn stays inside the r* term).
    proj = jnp.dot(emb, w_ih.T, precision=lax.Precision.HIGHEST)   # (V, 3H)
    bias = jnp.concatenate([b_ih[0:H] + b_hh[0:H],
                            b_ih[H:2 * H] + b_hh[H:2 * H],
                            b_ih[2 * H:3 * H]])
    proj = proj + bias[None, :]

    table = jnp.zeros((Vp, 3 * Hp), jnp.float32)
    whh_p = jnp.zeros((Hp, 3 * Hp), jnp.float32)
    for g in range(3):                                   # PyTorch gate order r,z,n
        table = table.at[0:V, g * Hp:g * Hp + H].set(proj[:, g * H:(g + 1) * H])
        whh_p = whh_p.at[0:H, g * Hp:g * Hp + H].set(w_hh[g * H:(g + 1) * H, :].T)

    bhn_p = jnp.zeros((1, Hp), jnp.float32).at[0, 0:H].set(b_hh[2 * H:3 * H])
    wout_p = jnp.zeros((Hp, Op), jnp.float32).at[0:H, 0:O].set(w_out.T)
    bout_p = jnp.zeros((1, Op), jnp.float32).at[0, 0:O].set(b_out)

    return {
        "table": table,                                  # (Vp, 3Hp) f32
        "whh": whh_p.astype(jnp.bfloat16),               # (Hp, 3Hp) bf16
        "bhn": bhn_p,                                    # (1, Hp)   f32
        "wout": wout_p.astype(jnp.bfloat16),             # (Hp, Op)  bf16
        "bout": bout_p,                                  # (1, Op)   f32
        "dims": dict(H=H, Hp=Hp, O=O, Op=Op, V=V, Vp=Vp),
    }


def bio_encoder_forward(bio, bio_lengths, packed, *, batch_tile=8):
    """bio: (B, T) int32 token ids; bio_lengths: (B,) int32 (sorted desc)."""
    d = packed["dims"]
    Hp, O, Op, Vp = d["Hp"], d["O"], d["Op"], d["Vp"]

    B, T = bio.shape
    BT = _round_up(batch_tile, 8)            # f32 sublane-aligned batch tile
    Bp = _round_up(max(B, BT), BT)
    nbt = Bp // BT

    # Per-call glue is integer-only: pad + permute token ids into
    # tile-major / time-major order for the in-kernel gather.
    ids = jnp.pad(bio.astype(jnp.int32), ((0, Bp - B), (0, 0)))       # (Bp, T)
    ids = ids.reshape(nbt, BT, T).transpose(0, 2, 1).reshape(-1)      # (nbt*T*BT,)
    lens = jnp.pad(bio_lengths.astype(jnp.int32), (0, Bp - B)).reshape(Bp, 1)

    flops = (2 * T * Bp * Hp * 3 * Hp        # recurrent hh matmuls
             + 2 * Bp * Hp * Op)             # linear head
    bytes_accessed = (ids.size * 4 + lens.size * 4
                      + packed["table"].size * 4 + packed["whh"].size * 2
                      + packed["bhn"].size * 4 + packed["wout"].size * 2
                      + packed["bout"].size * 4 + Bp * Op * 4)

    grid_spec = pltpu.PrefetchScalarGridSpec(
        num_scalar_prefetch=1,
        grid=(nbt,),
        in_specs=[
            pl.BlockSpec((BT, 1), lambda i, _ids: (i, 0)),            # lengths
            pl.BlockSpec((Vp, 3 * Hp), lambda i, _ids: (0, 0)),       # gi table
            pl.BlockSpec((Hp, 3 * Hp), lambda i, _ids: (0, 0)),       # W_hh
            pl.BlockSpec((1, Hp), lambda i, _ids: (0, 0)),            # b_hn
            pl.BlockSpec((Hp, Op), lambda i, _ids: (0, 0)),           # W_out
            pl.BlockSpec((1, Op), lambda i, _ids: (0, 0)),            # b_out
        ],
        out_specs=pl.BlockSpec((BT, Op), lambda i, _ids: (i, 0)),
        scratch_shapes=[pltpu.VMEM((T * BT, 3 * Hp), jnp.float32)],
    )

    out = pl.pallas_call(
        gru_encoder_kernel,
        out_shape=jax.ShapeDtypeStruct((Bp, Op), jnp.float32),
        grid_spec=grid_spec,
        compiler_params=pltpu.CompilerParams(
            dimension_semantics=("parallel",),
            vmem_limit_bytes=32 * 1024 * 1024),
        cost_estimate=pl.CostEstimate(flops=flops,
                                      transcendentals=3 * T * Bp * Hp,
                                      bytes_accessed=bytes_accessed),
    )(ids, lens, packed["table"], packed["whh"], packed["bhn"],
      packed["wout"], packed["bout"])

    return out[:B, :O]


def reference_forward(bio, bio_lengths, params):
    """Pure-JAX reference (PyTorch packed GRU + linear head), mirroring the
    kernel's bf16 MXU inputs for the recurrent / head matmuls (f32 acc)."""
    emb = params["emb"]
    w_ih, w_hh = params["w_ih"], params["w_hh"]
    b_ih, b_hh = params["b_ih"], params["b_hh"]
    w_out, b_out = params["w_out"], params["b_out"]
    B, T = bio.shape
    H = w_hh.shape[1]

    x = emb[bio]                                          # (B, T, D) f32
    wih_T = w_ih.T                                        # (D, 3H)  f32
    whh_T = w_hh.T.astype(jnp.bfloat16)                   # (H, 3H)  bf16
    lens = bio_lengths.reshape(B, 1)

    h = jnp.zeros((B, H), jnp.float32)
    for t in range(T):
        gi = jnp.dot(x[:, t, :], wih_T,
                     precision=lax.Precision.HIGHEST) + b_ih
        gh = jnp.dot(h.astype(jnp.bfloat16), whh_T,
                     preferred_element_type=jnp.float32) + b_hh
        i_r, i_z, i_n = gi[:, 0:H], gi[:, H:2 * H], gi[:, 2 * H:3 * H]
        h_r, h_z, h_n = gh[:, 0:H], gh[:, H:2 * H], gh[:, 2 * H:3 * H]
        r = jax.nn.sigmoid(i_r + h_r)
        z = jax.nn.sigmoid(i_z + h_z)
        n = jnp.tanh(i_n + r * h_n)
        h = jnp.where(lens > t, (1.0 - z) * n + z * h, h)
    return (jnp.dot(h.astype(jnp.bfloat16), w_out.T.astype(jnp.bfloat16),
                    preferred_element_type=jnp.float32) + b_out)


def make_params(key, n_bios, bio_dim, bio_rnn, bio_out):
    """Deterministic init mirroring PyTorch default inits (shapes matter)."""
    ks = jax.random.split(key, 7)
    k = 1.0 / jnp.sqrt(bio_rnn)
    return {
        "emb": jax.random.normal(ks[0], (n_bios, bio_dim), jnp.float32),
        "w_ih": jax.random.uniform(ks[1], (3 * bio_rnn, bio_dim), jnp.float32, -k, k),
        "w_hh": jax.random.uniform(ks[2], (3 * bio_rnn, bio_rnn), jnp.float32, -k, k),
        "b_ih": jax.random.uniform(ks[3], (3 * bio_rnn,), jnp.float32, -k, k),
        "b_hh": jax.random.uniform(ks[4], (3 * bio_rnn,), jnp.float32, -k, k),
        "w_out": jax.random.uniform(ks[5], (bio_out, bio_rnn), jnp.float32, -k, k),
        "b_out": jax.random.uniform(ks[6], (bio_out,), jnp.float32, -k, k),
    }


if __name__ == "__main__":
    # Small shapes consistent with the module's d_args.
    B, T = 2, 8
    n_bios, bio_dim, bio_rnn, bio_out = 16, 8, 32, 4

    key = jax.random.PRNGKey(0)
    k_tok, k_par = jax.random.split(key)

    bio = jax.random.randint(k_tok, (B, T), 0, n_bios, dtype=jnp.int32)
    # pack_padded_sequence default (enforce_sorted=True) => lengths sorted desc.
    bio_lengths = jnp.array([T, T - 3], dtype=jnp.int32)

    params = make_params(k_par, n_bios, bio_dim, bio_rnn, bio_out)
    packed = prepare_packed_params(params)     # one-time packing (hoisted)

    out = bio_encoder_forward(bio, bio_lengths, packed)
    out = jax.block_until_ready(out)

    ref = reference_forward(bio, bio_lengths, params)
    assert out.shape == (B, bio_out)
    # Recurrence mirrors bf16 MXU numerics; small drift vs the reference's
    # independent op ordering is expected.
    assert jnp.allclose(out, ref, atol=1e-2, rtol=1e-2), (out, ref)

    print("KERNEL_OK")
</pallas_src>

<mosaic_0001>
module attributes {stable_mosaic.version = 11 : i64} {
  func.func @gru_encoder_kernel(%arg0: i32, %arg1: memref<64xi32, #tpu.memory_space<smem>>, %arg2: memref<8x1xi32, #tpu.memory_space<vmem>>, %arg3: memref<16x384xf32, #tpu.memory_space<vmem>>, %arg4: memref<128x384xbf16, #tpu.memory_space<vmem>>, %arg5: memref<1x128xf32, #tpu.memory_space<vmem>>, %arg6: memref<128x128xbf16, #tpu.memory_space<vmem>>, %arg7: memref<1x128xf32, #tpu.memory_space<vmem>>, %arg8: memref<8x128xf32, #tpu.memory_space<vmem>>, %arg9: memref<64x384xf32, #tpu.memory_space<vmem>>) attributes {dimension_semantics = [#tpu.dimension_semantics<parallel>], iteration_bounds = array<i64: 1>, scalar_prefetch = 1 : i64, scratch_operands = 1 : i64, tpu.core_type = #tpu.core_type<tc>, window_params = [{transform_indices = @transform_0, window_bounds = array<i64: 8, 1>}, {pipeline_mode = #tpu.pipeline_mode<synchronous>, transform_indices = @transform_1, window_bounds = array<i64: 16, 384>}, {pipeline_mode = #tpu.pipeline_mode<synchronous>, transform_indices = @transform_2, window_bounds = array<i64: 128, 384>}, {pipeline_mode = #tpu.pipeline_mode<synchronous>, transform_indices = @transform_3, window_bounds = array<i64: 1, 128>}, {pipeline_mode = #tpu.pipeline_mode<synchronous>, transform_indices = @transform_4, window_bounds = array<i64: 128, 128>}, {pipeline_mode = #tpu.pipeline_mode<synchronous>, transform_indices = @transform_5, window_bounds = array<i64: 1, 128>}, {transform_indices = @transform_6, window_bounds = array<i64: 8, 128>}]} {
    %c64_i32 = arith.constant 64 : i32
    %0 = arith.muli %arg0, %c64_i32 : i32
    %c0_i32 = arith.constant 0 : i32
    %c64_i32_0 = arith.constant 64 : i32
    %1 = arith.addi %c0_i32, %c64_i32_0 : i32
    %c1_i32 = arith.constant 1 : i32
    scf.for %arg10 = %c0_i32 to %1 step %c1_i32  : i32 {
      %c1_i32_70 = arith.constant 1 : i32
      %310 = arith.muli %arg10, %c1_i32_70 : i32
      %c0_i32_71 = arith.constant 0 : i32
      %311 = arith.addi %c0_i32_71, %310 : i32
      %312 = arith.addi %0, %311 : i32
      %313 = arith.index_cast %312 : i32 to index
      %314 = memref.load %arg1[%313] : memref<64xi32, #tpu.memory_space<smem>>
      %315 = arith.index_cast %314 : i32 to index
      %c0_72 = arith.constant 0 : index
      %316 = vector.load %arg3[%315, %c0_72] : memref<16x384xf32, #tpu.memory_space<vmem>>, vector<1x384xf32>
      %317 = arith.index_cast %311 : i32 to index
      %c0_73 = arith.constant 0 : index
      %318 = vector.load %arg9[%317, %c0_73] : memref<64x384xf32, #tpu.memory_space<vmem>>, vector<1x384xf32>
      tpu.vector_store %arg9[%317, %c0_73], %316 {strides = array<i32>} : memref<64x384xf32, #tpu.memory_space<vmem>>, vector<1x384xf32>,
    }
    %c64_i32_1 = arith.constant 64 : i32
    %c0 = arith.constant 0 : index
    %c0_2 = arith.constant 0 : index
    %2 = vector.load %arg5[%c0, %c0_2] : memref<1x128xf32, #tpu.memory_space<vmem>>, vector<1x128xf32>
    %3 = vector.shape_cast %2 : vector<1x128xf32> to vector<1x128xf32>
    %4 = vector.broadcast %3 : vector<1x128xf32> to vector<8x128xf32>
    %c0_3 = arith.constant 0 : index
    %c0_4 = arith.constant 0 : index
    %5 = vector.load %arg2[%c0_3, %c0_4] : memref<8x1xi32, #tpu.memory_space<vmem>>, vector<8x1xi32>
    %cst = arith.constant 0.000000e+00 : f32
    %6 = vector.broadcast %cst : f32 to vector<8x128xf32>
    %c0_i32_5 = arith.constant 0 : i32
    %c8_i32 = arith.constant 8 : i32
    %7 = arith.muli %c0_i32_5, %c8_i32 : i32
    %8 = tpu.assume_multiple %7, 8 : i32
    %9 = arith.index_cast %8 : i32 to index
    %c0_6 = arith.constant 0 : index
    %10 = vector.load %arg9[%9, %c0_6] : memref<64x384xf32, #tpu.memory_space<vmem>>, vector<8x384xf32>
    %11 = arith.truncf %6 : vector<8x128xf32> to vector<8x128xbf16>
    %c0_7 = arith.constant 0 : index
    %c0_8 = arith.constant 0 : index
    %12 = vector.load %arg4[%c0_7, %c0_8] : memref<128x384xbf16, #tpu.memory_space<vmem>>, vector<128x384xbf16>
    %cst_9 = arith.constant dense<0.000000e+00> : vector<8x384xf32>
    %13 = tpu.matmul %11, %12, %cst_9 {dimension_numbers = #tpu.dot_dimension_numbers<[1], [0], [0], [1], [0, 0, 1, 1], [], []>} : vector<8x128xbf16>, vector<128x384xbf16>, vector<8x384xf32> -> vector<8x384xf32>
    %14 = vector.extract_strided_slice %10 {offsets = [0, 0], sizes = [8, 128], strides = [1, 1]} : vector<8x384xf32> to vector<8x128xf32>
    %15 = vector.extract_strided_slice %13 {offsets = [0, 0], sizes = [8, 128], strides = [1, 1]} : vector<8x384xf32> to vector<8x128xf32>
    %16 = arith.addf %14, %15 : vector<8x128xf32>
    %17 = arith.negf %16 : vector<8x128xf32>
    %18 = math.exp %17 : vector<8x128xf32>
    %cst_10 = arith.constant 1.000000e+00 : f32
    %19 = vector.broadcast %cst_10 : f32 to vector<8x128xf32>
    %20 = arith.addf %19, %18 : vector<8x128xf32>
    %21 = arith.divf %19, %20 : vector<8x128xf32>
    %22 = vector.extract_strided_slice %10 {offsets = [0, 128], sizes = [8, 128], strides = [1, 1]} : vector<8x384xf32> to vector<8x128xf32>
    %23 = vector.extract_strided_slice %13 {offsets = [0, 128], sizes = [8, 128], strides = [1, 1]} : vector<8x384xf32> to vector<8x128xf32>
    %24 = arith.addf %22, %23 : vector<8x128xf32>
    %25 = arith.negf %24 : vector<8x128xf32>
    %26 = math.exp %25 : vector<8x128xf32>
    %cst_11 = arith.constant 1.000000e+00 : f32
    %27 = vector.broadcast %cst_11 : f32 to vector<8x128xf32>
    %28 = arith.addf %27, %26 : vector<8x128xf32>
    %29 = arith.divf %27, %28 : vector<8x128xf32>
    %30 = vector.extract_strided_slice %10 {offsets = [0, 256], sizes = [8, 128], strides = [1, 1]} : vector<8x384xf32> to vector<8x128xf32>
    %31 = vector.extract_strided_slice %13 {offsets = [0, 256], sizes = [8, 128], strides = [1, 1]} : vector<8x384xf32> to vector<8x128xf32>
    %32 = arith.addf %31, %4 : vector<8x128xf32>
    %33 = arith.mulf %21, %32 : vector<8x128xf32>
    %34 = arith.addf %30, %33 : vector<8x128xf32>
    %35 = math.tanh %34 : vector<8x128xf32>
    %36 = arith.subf %6, %35 : vector<8x128xf32>
    %37 = arith.mulf %29, %36 : vector<8x128xf32>
    %38 = arith.addf %35, %37 : vector<8x128xf32>
    %39 = vector.broadcast %c0_i32_5 : i32 to vector<8x1xi32>
    %40 = arith.cmpi sgt, %5, %39 : vector<8x1xi32>
    %41 = vector.shape_cast %40 : vector<8x1xi1> to vector<8x1xi1>
    %42 = vector.broadcast %41 : vector<8x1xi1> to vector<8x128xi1>
    %43 = arith.select %42, %38, %6 : vector<8x128xi1>, vector<8x128xf32>
    %c1_i32_12 = arith.constant 1 : i32
    %c8_i32_13 = arith.constant 8 : i32
    %44 = arith.muli %c1_i32_12, %c8_i32_13 : i32
    %45 = tpu.assume_multiple %44, 8 : i32
    %46 = arith.index_cast %45 : i32 to index
    %c0_14 = arith.constant 0 : index
    %47 = vector.load %arg9[%46, %c0_14] : memref<64x384xf32, #tpu.memory_space<vmem>>, vector<8x384xf32>
    %48 = arith.truncf %43 : vector<8x128xf32> to vector<8x128xbf16>
    %c0_15 = arith.constant 0 : index
    %c0_16 = arith.constant 0 : index
    %49 = vector.load %arg4[%c0_15, %c0_16] : memref<128x384xbf16, #tpu.memory_space<vmem>>, vector<128x384xbf16>
    %cst_17 = arith.constant dense<0.000000e+00> : vector<8x384xf32>
    %50 = tpu.matmul %48, %49, %cst_17 {dimension_numbers = #tpu.dot_dimension_numbers<[1], [0], [0], [1], [0, 0, 1, 1], [], []>} : vector<8x128xbf16>, vector<128x384xbf16>, vector<8x384xf32> -> vector<8x384xf32>
    %51 = vector.extract_strided_slice %47 {offsets = [0, 0], sizes = [8, 128], strides = [1, 1]} : vector<8x384xf32> to vector<8x128xf32>
    %52 = vector.extract_strided_slice %50 {offsets = [0, 0], sizes = [8, 128], strides = [1, 1]} : vector<8x384xf32> to vector<8x128xf32>
    %53 = arith.addf %51, %52 : vector<8x128xf32>
    %54 = arith.negf %53 : vector<8x128xf32>
    %55 = math.exp %54 : vector<8x128xf32>
    %cst_18 = arith.constant 1.000000e+00 : f32
    %56 = vector.broadcast %cst_18 : f32 to vector<8x128xf32>
    %57 = arith.addf %56, %55 : vector<8x128xf32>
    %58 = arith.divf %56, %57 : vector<8x128xf32>
    %59 = vector.extract_strided_slice %47 {offsets = [0, 128], sizes = [8, 128], strides = [1, 1]} : vector<8x384xf32> to vector<8x128xf32>
    %60 = vector.extract_strided_slice %50 {offsets = [0, 128], sizes = [8, 128], strides = [1, 1]} : vector<8x384xf32> to vector<8x128xf32>
    %61 = arith.addf %59, %60 : vector<8x128xf32>
    %62 = arith.negf %61 : vector<8x128xf32>
    %63 = math.exp %62 : vector<8x128xf32>
    %cst_19 = arith.constant 1.000000e+00 : f32
    %64 = vector.broadcast %cst_19 : f32 to vector<8x128xf32>
    %65 = arith.addf %64, %63 : vector<8x128xf32>
    %66 = arith.divf %64, %65 : vector<8x128xf32>
    %67 = vector.extract_strided_slice %47 {offsets = [0, 256], sizes = [8, 128], strides = [1, 1]} : vector<8x384xf32> to vector<8x128xf32>
    %68 = vector.extract_strided_slice %50 {offsets = [0, 256], sizes = [8, 128], strides = [1, 1]} : vector<8x384xf32> to vector<8x128xf32>
    %69 = arith.addf %68, %4 : vector<8x128xf32>
    %70 = arith.mulf %58, %69 : vector<8x128xf32>
    %71 = arith.addf %67, %70 : vector<8x128xf32>
    %72 = math.tanh %71 : vector<8x128xf32>
    %73 = arith.subf %43, %72 : vector<8x128xf32>
    %74 = arith.mulf %66, %73 : vector<8x128xf32>
    %75 = arith.addf %72, %74 : vector<8x128xf32>
    %76 = vector.broadcast %c1_i32_12 : i32 to vector<8x1xi32>
    %77 = arith.cmpi sgt, %5, %76 : vector<8x1xi32>
    %78 = vector.shape_cast %77 : vector<8x1xi1> to vector<8x1xi1>
    %79 = vector.broadcast %78 : vector<8x1xi1> to vector<8x128xi1>
    %80 = arith.select %79, %75, %43 : vector<8x128xi1>, vector<8x128xf32>
    %c2_i32 = arith.constant 2 : i32
    %c8_i32_20 = arith.constant 8 : i32
    %81 = arith.muli %c2_i32, %c8_i32_20 : i32
    %82 = tpu.assume_multiple %81, 8 : i32
    %83 = arith.index_cast %82 : i32 to index
    %c0_21 = arith.constant 0 : index
    %84 = vector.load %arg9[%83, %c0_21] : memref<64x384xf32, #tpu.memory_space<vmem>>, vector<8x384xf32>
    %85 = arith.truncf %80 : vector<8x128xf32> to vector<8x128xbf16>
    %c0_22 = arith.constant 0 : index
    %c0_23 = arith.constant 0 : index
    %86 = vector.load %arg4[%c0_22, %c0_23] : memref<128x384xbf16, #tpu.memory_space<vmem>>, vector<128x384xbf16>
    %cst_24 = arith.constant dense<0.000000e+00> : vector<8x384xf32>
    %87 = tpu.matmul %85, %86, %cst_24 {dimension_numbers = #tpu.dot_dimension_numbers<[1], [0], [0], [1], [0, 0, 1, 1], [], []>} : vector<8x128xbf16>, vector<128x384xbf16>, vector<8x384xf32> -> vector<8x384xf32>
    %88 = vector.extract_strided_slice %84 {offsets = [0, 0], sizes = [8, 128], strides = [1, 1]} : vector<8x384xf32> to vector<8x128xf32>
    %89 = vector.extract_strided_slice %87 {offsets = [0, 0], sizes = [8, 128], strides = [1, 1]} : vector<8x384xf32> to vector<8x128xf32>
    %90 = arith.addf %88, %89 : vector<8x128xf32>
    %91 = arith.negf %90 : vector<8x128xf32>
    %92 = math.exp %91 : vector<8x128xf32>
    %cst_25 = arith.constant 1.000000e+00 : f32
    %93 = vector.broadcast %cst_25 : f32 to vector<8x128xf32>
    %94 = arith.addf %93, %92 : vector<8x128xf32>
    %95 = arith.divf %93, %94 : vector<8x128xf32>
    %96 = vector.extract_strided_slice %84 {offsets = [0, 128], sizes = [8, 128], strides = [1, 1]} : vector<8x384xf32> to vector<8x128xf32>
    %97 = vector.extract_strided_slice %87 {offsets = [0, 128], sizes = [8, 128], strides = [1, 1]} : vector<8x384xf32> to vector<8x128xf32>
    %98 = arith.addf %96, %97 : vector<8x128xf32>
    %99 = arith.negf %98 : vector<8x128xf32>
    %100 = math.exp %99 : vector<8x128xf32>
    %cst_26 = arith.constant 1.000000e+00 : f32
    %101 = vector.broadcast %cst_26 : f32 to vector<8x128xf32>
    %102 = arith.addf %101, %100 : vector<8x128xf32>
    %103 = arith.divf %101, %102 : vector<8x128xf32>
    %104 = vector.extract_strided_slice %84 {offsets = [0, 256], sizes = [8, 128], strides = [1, 1]} : vector<8x384xf32> to vector<8x128xf32>
    %105 = vector.extract_strided_slice %87 {offsets = [0, 256], sizes = [8, 128], strides = [1, 1]} : vector<8x384xf32> to vector<8x128xf32>
    %106 = arith.addf %105, %4 : vector<8x128xf32>
    %107 = arith.mulf %95, %106 : vector<8x128xf32>
    %108 = arith.addf %104, %107 : vector<8x128xf32>
    %109 = math.tanh %108 : vector<8x128xf32>
    %110 = arith.subf %80, %109 : vector<8x128xf32>
    %111 = arith.mulf %103, %110 : vector<8x128xf32>
    %112 = arith.addf %109, %111 : vector<8x128xf32>
    %113 = vector.broadcast %c2_i32 : i32 to vector<8x1xi32>
    %114 = arith.cmpi sgt, %5, %113 : vector<8x1xi32>
    %115 = vector.shape_cast %114 : vector<8x1xi1> to vector<8x1xi1>
    %116 = vector.broadcast %115 : vector<8x1xi1> to vector<8x128xi1>
    %117 = arith.select %116, %112, %80 : vector<8x128xi1>, vector<8x128xf32>
    %c3_i32 = arith.constant 3 : i32
    %c8_i32_27 = arith.constant 8 : i32
    %118 = arith.muli %c3_i32, %c8_i32_27 : i32
    %119 = tpu.assume_multiple %118, 8 : i32
    %120 = arith.index_cast %119 : i32 to index
    %c0_28 = arith.constant 0 : index
    %121 = vector.load %arg9[%120, %c0_28] : memref<64x384xf32, #tpu.memory_space<vmem>>, vector<8x384xf32>
    %122 = arith.truncf %117 : vector<8x128xf32> to vector<8x128xbf16>
    %c0_29 = arith.constant 0 : index
    %c0_30 = arith.constant 0 : index
    %123 = vector.load %arg4[%c0_29, %c0_30] : memref<128x384xbf16, #tpu.memory_space<vmem>>, vector<128x384xbf16>
    %cst_31 = arith.constant dense<0.000000e+00> : vector<8x384xf32>
    %124 = tpu.matmul %122, %123, %cst_31 {dimension_numbers = #tpu.dot_dimension_numbers<[1], [0], [0], [1], [0, 0, 1, 1], [], []>} : vector<8x128xbf16>, vector<128x384xbf16>, vector<8x384xf32> -> vector<8x384xf32>
    %125 = vector.extract_strided_slice %121 {offsets = [0, 0], sizes = [8, 128], strides = [1, 1]} : vector<8x384xf32> to vector<8x128xf32>
    %126 = vector.extract_strided_slice %124 {offsets = [0, 0], sizes = [8, 128], strides = [1, 1]} : vector<8x384xf32> to vector<8x128xf32>
    %127 = arith.addf %125, %126 : vector<8x128xf32>
    %128 = arith.negf %127 : vector<8x128xf32>
    %129 = math.exp %128 : vector<8x128xf32>
    %cst_32 = arith.constant 1.000000e+00 : f32
    %130 = vector.broadcast %cst_32 : f32 to vector<8x128xf32>
    %131 = arith.addf %130, %129 : vector<8x128xf32>
    %132 = arith.divf %130, %131 : vector<8x128xf32>
    %133 = vector.extract_strided_slice %121 {offsets = [0, 128], sizes = [8, 128], strides = [1, 1]} : vector<8x384xf32> to vector<8x128xf32>
    %134 = vector.extract_strided_slice %124 {offsets = [0, 128], sizes = [8, 128], strides = [1, 1]} : vector<8x384xf32> to vector<8x128xf32>
    %135 = arith.addf %133, %134 : vector<8x128xf32>
    %136 = arith.negf %135 : vector<8x128xf32>
    %137 = math.exp %136 : vector<8x128xf32>
    %cst_33 = arith.constant 1.000000e+00 : f32
    %138 = vector.broadcast %cst_33 : f32 to vector<8x128xf32>
    %139 = arith.addf %138, %137 : vector<8x128xf32>
    %140 = arith.divf %138, %139 : vector<8x128xf32>
    %141 = vector.extract_strided_slice %121 {offsets = [0, 256], sizes = [8, 128], strides = [1, 1]} : vector<8x384xf32> to vector<8x128xf32>
    %142 = vector.extract_strided_slice %124 {offsets = [0, 256], sizes = [8, 128], strides = [1, 1]} : vector<8x384xf32> to vector<8x128xf32>
    %143 = arith.addf %142, %4 : vector<8x128xf32>
    %144 = arith.mulf %132, %143 : vector<8x128xf32>
    %145 = arith.addf %141, %144 : vector<8x128xf32>
    %146 = math.tanh %145 : vector<8x128xf32>
    %147 = arith.subf %117, %146 : vector<8x128xf32>
    %148 = arith.mulf %140, %147 : vector<8x128xf32>
    %149 = arith.addf %146, %148 : vector<8x128xf32>
    %150 = vector.broadcast %c3_i32 : i32 to vector<8x1xi32>
    %151 = arith.cmpi sgt, %5, %150 : vector<8x1xi32>
    %152 = vector.shape_cast %151 : vector<8x1xi1> to vector<8x1xi1>
    %153 = vector.broadcast %152 : vector<8x1xi1> to vector<8x128xi1>
    %154 = arith.select %153, %149, %117 : vector<8x128xi1>, vector<8x128xf32>
    %c4_i32 = arith.constant 4 : i32
    %c8_i32_34 = arith.constant 8 : i32
    %155 = arith.muli %c4_i32, %c8_i32_34 : i32
    %156 = tpu.assume_multiple %155, 8 : i32
    %157 = arith.index_cast %156 : i32 to index
    %c0_35 = arith.constant 0 : index
    %158 = vector.load %arg9[%157, %c0_35] : memref<64x384xf32, #tpu.memory_space<vmem>>, vector<8x384xf32>
    %159 = arith.truncf %154 : vector<8x128xf32> to vector<8x128xbf16>
    %c0_36 = arith.constant 0 : index
    %c0_37 = arith.constant 0 : index
    %160 = vector.load %arg4[%c0_36, %c0_37] : memref<128x384xbf16, #tpu.memory_space<vmem>>, vector<128x384xbf16>
    %cst_38 = arith.constant dense<0.000000e+00> : vector<8x384xf32>
    %161 = tpu.matmul %159, %160, %cst_38 {dimension_numbers = #tpu.dot_dimension_numbers<[1], [0], [0], [1], [0, 0, 1, 1], [], []>} : vector<8x128xbf16>, vector<128x384xbf16>, vector<8x384xf32> -> vector<8x384xf32>
    %162 = vector.extract_strided_slice %158 {offsets = [0, 0], sizes = [8, 128], strides = [1, 1]} : vector<8x384xf32> to vector<8x128xf32>
    %163 = vector.extract_strided_slice %161 {offsets = [0, 0], sizes = [8, 128], strides = [1, 1]} : vector<8x384xf32> to vector<8x128xf32>
    %164 = arith.addf %162, %163 : vector<8x128xf32>
    %165 = arith.negf %164 : vector<8x128xf32>
    %166 = math.exp %165 : vector<8x128xf32>
    %cst_39 = arith.constant 1.000000e+00 : f32
    %167 = vector.broadcast %cst_39 : f32 to vector<8x128xf32>
    %168 = arith.addf %167, %166 : vector<8x128xf32>
    %169 = arith.divf %167, %168 : vector<8x128xf32>
    %170 = vector.extract_strided_slice %158 {offsets = [0, 128], sizes = [8, 128], strides = [1, 1]} : vector<8x384xf32> to vector<8x128xf32>
    %171 = vector.extract_strided_slice %161 {offsets = [0, 128], sizes = [8, 128], strides = [1, 1]} : vector<8x384xf32> to vector<8x128xf32>
    %172 = arith.addf %170, %171 : vector<8x128xf32>
    %173 = arith.negf %172 : vector<8x128xf32>
    %174 = math.exp %173 : vector<8x128xf32>
    %cst_40 = arith.constant 1.000000e+00 : f32
    %175 = vector.broadcast %cst_40 : f32 to vector<8x128xf32>
    %176 = arith.addf %175, %174 : vector<8x128xf32>
    %177 = arith.divf %175, %176 : vector<8x128xf32>
    %178 = vector.extract_strided_slice %158 {offsets = [0, 256], sizes = [8, 128], strides = [1, 1]} : vector<8x384xf32> to vector<8x128xf32>
    %179 = vector.extract_strided_slice %161 {offsets = [0, 256], sizes = [8, 128], strides = [1, 1]} : vector<8x384xf32> to vector<8x128xf32>
    %180 = arith.addf %179, %4 : vector<8x128xf32>
    %181 = arith.mulf %169, %180 : vector<8x128xf32>
    %182 = arith.addf %178, %181 : vector<8x128xf32>
    %183 = math.tanh %182 : vector<8x128xf32>
    %184 = arith.subf %154, %183 : vector<8x128xf32>
    %185 = arith.mulf %177, %184 : vector<8x128xf32>
    %186 = arith.addf %183, %185 : vector<8x128xf32>
    %187 = vector.broadcast %c4_i32 : i32 to vector<8x1xi32>
    %188 = arith.cmpi sgt, %5, %187 : vector<8x1xi32>
    %189 = vector.shape_cast %188 : vector<8x1xi1> to vector<8x1xi1>
    %190 = vector.broadcast %189 : vector<8x1xi1> to vector<8x128xi1>
    %191 = arith.select %190, %186, %154 : vector<8x128xi1>, vector<8x128xf32>
    %c5_i32 = arith.constant 5 : i32
    %c8_i32_41 = arith.constant 8 : i32
    %192 = arith.muli %c5_i32, %c8_i32_41 : i32
    %193 = tpu.assume_multiple %192, 8 : i32
    %194 = arith.index_cast %193 : i32 to index
    %c0_42 = arith.constant 0 : index
    %195 = vector.load %arg9[%194, %c0_42] : memref<64x384xf32, #tpu.memory_space<vmem>>, vector<8x384xf32>
    %196 = arith.truncf %191 : vector<8x128xf32> to vector<8x128xbf16>
    %c0_43 = arith.constant 0 : index
    %c0_44 = arith.constant 0 : index
    %197 = vector.load %arg4[%c0_43, %c0_44] : memref<128x384xbf16, #tpu.memory_space<vmem>>, vector<128x384xbf16>
    %cst_45 = arith.constant dense<0.000000e+00> : vector<8x384xf32>
    %198 = tpu.matmul %196, %197, %cst_45 {dimension_numbers = #tpu.dot_dimension_numbers<[1], [0], [0], [1], [0, 0, 1, 1], [], []>} : vector<8x128xbf16>, vector<128x384xbf16>, vector<8x384xf32> -> vector<8x384xf32>
    %199 = vector.extract_strided_slice %195 {offsets = [0, 0], sizes = [8, 128], strides = [1, 1]} : vector<8x384xf32> to vector<8x128xf32>
    %200 = vector.extract_strided_slice %198 {offsets = [0, 0], sizes = [8, 128], strides = [1, 1]} : vector<8x384xf32> to vector<8x128xf32>
    %201 = arith.addf %199, %200 : vector<8x128xf32>
    %202 = arith.negf %201 : vector<8x128xf32>
    %203 = math.exp %202 : vector<8x128xf32>
    %cst_46 = arith.constant 1.000000e+00 : f32
    %204 = vector.broadcast %cst_46 : f32 to vector<8x128xf32>
    %205 = arith.addf %204, %203 : vector<8x128xf32>
    %206 = arith.divf %204, %205 : vector<8x128xf32>
    %207 = vector.extract_strided_slice %195 {offsets = [0, 128], sizes = [8, 128], strides = [1, 1]} : vector<8x384xf32> to vector<8x128xf32>
    %208 = vector.extract_strided_slice %198 {offsets = [0, 128], sizes = [8, 128], strides = [1, 1]} : vector<8x384xf32> to vector<8x128xf32>
    %209 = arith.addf %207, %208 : vector<8x128xf32>
    %210 = arith.negf %209 : vector<8x128xf32>
    %211 = math.exp %210 : vector<8x128xf32>
    %cst_47 = arith.constant 1.000000e+00 : f32
    %212 = vector.broadcast %cst_47 : f32 to vector<8x128xf32>
    %213 = arith.addf %212, %211 : vector<8x128xf32>
    %214 = arith.divf %212, %213 : vector<8x128xf32>
    %215 = vector.extract_strided_slice %195 {offsets = [0, 256], sizes = [8, 128], strides = [1, 1]} : vector<8x384xf32> to vector<8x128xf32>
    %216 = vector.extract_strided_slice %198 {offsets = [0, 256], sizes = [8, 128], strides = [1, 1]} : vector<8x384xf32> to vector<8x128xf32>
    %217 = arith.addf %216, %4 : vector<8x128xf32>
    %218 = arith.mulf %206, %217 : vector<8x128xf32>
    %219 = arith.addf %215, %218 : vector<8x128xf32>
    %220 = math.tanh %219 : vector<8x128xf32>
    %221 = arith.subf %191, %220 : vector<8x128xf32>
    %222 = arith.mulf %214, %221 : vector<8x128xf32>
    %223 = arith.addf %220, %222 : vector<8x128xf32>
    %224 = vector.broadcast %c5_i32 : i32 to vector<8x1xi32>
    %225 = arith.cmpi sgt, %5, %224 : vector<8x1xi32>
    %226 = vector.shape_cast %225 : vector<8x1xi1> to vector<8x1xi1>
    %227 = vector.broadcast %226 : vector<8x1xi1> to vector<8x128xi1>
    %228 = arith.select %227, %223, %191 : vector<8x128xi1>, vector<8x128xf32>
    %c6_i32 = arith.constant 6 : i32
    %c8_i32_48 = arith.constant 8 : i32
    %229 = arith.muli %c6_i32, %c8_i32_48 : i32
    %230 = tpu.assume_multiple %229, 8 : i32
    %231 = arith.index_cast %230 : i32 to index
    %c0_49 = arith.constant 0 : index
    %232 = vector.load %arg9[%231, %c0_49] : memref<64x384xf32, #tpu.memory_space<vmem>>, vector<8x384xf32>
    %233 = arith.truncf %228 : vector<8x128xf32> to vector<8x128xbf16>
    %c0_50 = arith.constant 0 : index
    %c0_51 = arith.constant 0 : index
    %234 = vector.load %arg4[%c0_50, %c0_51] : memref<128x384xbf16, #tpu.memory_space<vmem>>, vector<128x384xbf16>
    %cst_52 = arith.constant dense<0.000000e+00> : vector<8x384xf32>
    %235 = tpu.matmul %233, %234, %cst_52 {dimension_numbers = #tpu.dot_dimension_numbers<[1], [0], [0], [1], [0, 0, 1, 1], [], []>} : vector<8x128xbf16>, vector<128x384xbf16>, vector<8x384xf32> -> vector<8x384xf32>
    %236 = vector.extract_strided_slice %232 {offsets = [0, 0], sizes = [8, 128], strides = [1, 1]} : vector<8x384xf32> to vector<8x128xf32>
    %237 = vector.extract_strided_slice %235 {offsets = [0, 0], sizes = [8, 128], strides = [1, 1]} : vector<8x384xf32> to vector<8x128xf32>
    %238 = arith.addf %236, %237 : vector<8x128xf32>
    %239 = arith.negf %238 : vector<8x128xf32>
    %240 = math.exp %239 : vector<8x128xf32>
    %cst_53 = arith.constant 1.000000e+00 : f32
    %241 = vector.broadcast %cst_53 : f32 to vector<8x128xf32>
    %242 = arith.addf %241, %240 : vector<8x128xf32>
    %243 = arith.divf %241, %242 : vector<8x128xf32>
    %244 = vector.extract_strided_slice %232 {offsets = [0, 128], sizes = [8, 128], strides = [1, 1]} : vector<8x384xf32> to vector<8x128xf32>
    %245 = vector.extract_strided_slice %235 {offsets = [0, 128], sizes = [8, 128], strides = [1, 1]} : vector<8x384xf32> to vector<8x128xf32>
    %246 = arith.addf %244, %245 : vector<8x128xf32>
    %247 = arith.negf %246 : vector<8x128xf32>
    %248 = math.exp %247 : vector<8x128xf32>
    %cst_54 = arith.constant 1.000000e+00 : f32
    %249 = vector.broadcast %cst_54 : f32 to vector<8x128xf32>
    %250 = arith.addf %249, %248 : vector<8x128xf32>
    %251 = arith.divf %249, %250 : vector<8x128xf32>
    %252 = vector.extract_strided_slice %232 {offsets = [0, 256], sizes = [8, 128], strides = [1, 1]} : vector<8x384xf32> to vector<8x128xf32>
    %253 = vector.extract_strided_slice %235 {offsets = [0, 256], sizes = [8, 128], strides = [1, 1]} : vector<8x384xf32> to vector<8x128xf32>
    %254 = arith.addf %253, %4 : vector<8x128xf32>
    %255 = arith.mulf %243, %254 : vector<8x128xf32>
    %256 = arith.addf %252, %255 : vector<8x128xf32>
    %257 = math.tanh %256 : vector<8x128xf32>
    %258 = arith.subf %228, %257 : vector<8x128xf32>
    %259 = arith.mulf %251, %258 : vector<8x128xf32>
    %260 = arith.addf %257, %259 : vector<8x128xf32>
    %261 = vector.broadcast %c6_i32 : i32 to vector<8x1xi32>
    %262 = arith.cmpi sgt, %5, %261 : vector<8x1xi32>
    %263 = vector.shape_cast %262 : vector<8x1xi1> to vector<8x1xi1>
    %264 = vector.broadcast %263 : vector<8x1xi1> to vector<8x128xi1>
    %265 = arith.select %264, %260, %228 : vector<8x128xi1>, vector<8x128xf32>
    %c7_i32 = arith.constant 7 : i32
    %c8_i32_55 = arith.constant 8 : i32
    %266 = arith.muli %c7_i32, %c8_i32_55 : i32
    %267 = tpu.assume_multiple %266, 8 : i32
    %268 = arith.index_cast %267 : i32 to index
    %c0_56 = arith.constant 0 : index
    %269 = vector.load %arg9[%268, %c0_56] : memref<64x384xf32, #tpu.memory_space<vmem>>, vector<8x384xf32>
    %270 = arith.truncf %265 : vector<8x128xf32> to vector<8x128xbf16>
    %c0_57 = arith.constant 0 : index
    %c0_58 = arith.constant 0 : index
    %271 = vector.load %arg4[%c0_57, %c0_58] : memref<128x384xbf16, #tpu.memory_space<vmem>>, vector<128x384xbf16>
    %cst_59 = arith.constant dense<0.000000e+00> : vector<8x384xf32>
    %272 = tpu.matmul %270, %271, %cst_59 {dimension_numbers = #tpu.dot_dimension_numbers<[1], [0], [0], [1], [0, 0, 1, 1], [], []>} : vector<8x128xbf16>, vector<128x384xbf16>, vector<8x384xf32> -> vector<8x384xf32>
    %273 = vector.extract_strided_slice %269 {offsets = [0, 0], sizes = [8, 128], strides = [1, 1]} : vector<8x384xf32> to vector<8x128xf32>
    %274 = vector.extract_strided_slice %272 {offsets = [0, 0], sizes = [8, 128], strides = [1, 1]} : vector<8x384xf32> to vector<8x128xf32>
    %275 = arith.addf %273, %274 : vector<8x128xf32>
    %276 = arith.negf %275 : vector<8x128xf32>
    %277 = math.exp %276 : vector<8x128xf32>
    %cst_60 = arith.constant 1.000000e+00 : f32
    %278 = vector.broadcast %cst_60 : f32 to vector<8x128xf32>
    %279 = arith.addf %278, %277 : vector<8x128xf32>
    %280 = arith.divf %278, %279 : vector<8x128xf32>
    %281 = vector.extract_strided_slice %269 {offsets = [0, 128], sizes = [8, 128], strides = [1, 1]} : vector<8x384xf32> to vector<8x128xf32>
    %282 = vector.extract_strided_slice %272 {offsets = [0, 128], sizes = [8, 128], strides = [1, 1]} : vector<8x384xf32> to vector<8x128xf32>
    %283 = arith.addf %281, %282 : vector<8x128xf32>
    %284 = arith.negf %283 : vector<8x128xf32>
    %285 = math.exp %284 : vector<8x128xf32>
    %cst_61 = arith.constant 1.000000e+00 : f32
    %286 = vector.broadcast %cst_61 : f32 to vector<8x128xf32>
    %287 = arith.addf %286, %285 : vector<8x128xf32>
    %288 = arith.divf %286, %287 : vector<8x128xf32>
    %289 = vector.extract_strided_slice %269 {offsets = [0, 256], sizes = [8, 128], strides = [1, 1]} : vector<8x384xf32> to vector<8x128xf32>
    %290 = vector.extract_strided_slice %272 {offsets = [0, 256], sizes = [8, 128], strides = [1, 1]} : vector<8x384xf32> to vector<8x128xf32>
    %291 = arith.addf %290, %4 : vector<8x128xf32>
    %292 = arith.mulf %280, %291 : vector<8x128xf32>
    %293 = arith.addf %289, %292 : vector<8x128xf32>
    %294 = math.tanh %293 : vector<8x128xf32>
    %295 = arith.subf %265, %294 : vector<8x128xf32>
    %296 = arith.mulf %288, %295 : vector<8x128xf32>
    %297 = arith.addf %294, %296 : vector<8x128xf32>
    %298 = vector.broadcast %c7_i32 : i32 to vector<8x1xi32>
    %299 = arith.cmpi sgt, %5, %298 : vector<8x1xi32>
    %300 = vector.shape_cast %299 : vector<8x1xi1> to vector<8x1xi1>
    %301 = vector.broadcast %300 : vector<8x1xi1> to vector<8x128xi1>
    %302 = arith.select %301, %297, %265 : vector<8x128xi1>, vector<8x128xf32>
    %c8_i32_62 = arith.constant 8 : i32
    %303 = arith.truncf %302 : vector<8x128xf32> to vector<8x128xbf16>
    %c0_63 = arith.constant 0 : index
    %c0_64 = arith.constant 0 : index
    %304 = vector.load %arg6[%c0_63, %c0_64] : memref<128x128xbf16, #tpu.memory_space<vmem>>, vector<128x128xbf16>
    %cst_65 = arith.constant dense<0.000000e+00> : vector<8x128xf32>
    %305 = tpu.matmul %303, %304, %cst_65 {dimension_numbers = #tpu.dot_dimension_numbers<[1], [0], [0], [1], [0, 0, 1, 1], [], []>} : vector<8x128xbf16>, vector<128x128xbf16>, vector<8x128xf32> -> vector<8x128xf32>
    %c0_66 = arith.constant 0 : index
    %c0_67 = arith.constant 0 : index
    %306 = vector.load %arg7[%c0_66, %c0_67] : memref<1x128xf32, #tpu.memory_space<vmem>>, vector<1x128xf32>
    %307 = vector.broadcast %306 : vector<1x128xf32> to vector<8x128xf32>
    %308 = arith.addf %305, %307 : vector<8x128xf32>
    %c0_68 = arith.constant 0 : index
    %c0_69 = arith.constant 0 : index
    %309 = vector.load %arg8[%c0_68, %c0_69] : memref<8x128xf32, #tpu.memory_space<vmem>>, vector<8x128xf32>
    tpu.vector_store %arg8[%c0_68, %c0_69], %308 {strides = array<i32>} : memref<8x128xf32, #tpu.memory_space<vmem>>, vector<8x128xf32>,
    return
  }
  func.func @transform_0(%arg0: i32, %arg1: memref<64xi32, #tpu.memory_space<smem>>) -> (i32, i32) {
    %c0_i32 = arith.constant 0 : i32
    %c0_i32_0 = arith.constant 0 : i32
    return %arg0, %c0_i32 : i32, i32
  }
  func.func @transform_1(%arg0: i32, %arg1: memref<64xi32, #tpu.memory_space<smem>>) -> (i32, i32) {
    %c0_i32 = arith.constant 0 : i32
    %c0_i32_0 = arith.constant 0 : i32
    %c0_i32_1 = arith.constant 0 : i32
    return %c0_i32, %c0_i32_0 : i32, i32
  }
  func.func @transform_2(%arg0: i32, %arg1: memref<64xi32, #tpu.memory_space<smem>>) -> (i32, i32) {
    %c0_i32 = arith.constant 0 : i32
    %c0_i32_0 = arith.constant 0 : i32
    %c0_i32_1 = arith.constant 0 : i32
    return %c0_i32, %c0_i32_0 : i32, i32
  }
  func.func @transform_3(%arg0: i32, %arg1: memref<64xi32, #tpu.memory_space<smem>>) -> (i32, i32) {
    %c0_i32 = arith.constant 0 : i32
    %c0_i32_0 = arith.constant 0 : i32
    %c0_i32_1 = arith.constant 0 : i32
    return %c0_i32, %c0_i32_0 : i32, i32
  }
  func.func @transform_4(%arg0: i32, %arg1: memref<64xi32, #tpu.memory_space<smem>>) -> (i32, i32) {
    %c0_i32 = arith.constant 0 : i32
    %c0_i32_0 = arith.constant 0 : i32
    %c0_i32_1 = arith.constant 0 : i32
    return %c0_i32, %c0_i32_0 : i32, i32
  }
  func.func @transform_5(%arg0: i32, %arg1: memref<64xi32, #tpu.memory_space<smem>>) -> (i32, i32) {
    %c0_i32 = arith.constant 0 : i32
    %c0_i32_0 = arith.constant 0 : i32
    %c0_i32_1 = arith.constant 0 : i32
    return %c0_i32, %c0_i32_0 : i32, i32
  }
  func.func @transform_6(%arg0: i32, %arg1: memref<64xi32, #tpu.memory_space<smem>>) -> (i32, i32) {
    %c0_i32 = arith.constant 0 : i32
    %c0_i32_0 = arith.constant 0 : i32
    return %arg0, %c0_i32 : i32, i32
  }
}

</mosaic_0001>

<llo_original>
// kernel: tpu_custom_call.1
$region0: #{tpu_custom_call.1}
  #allocation0 [shape = 'u32[]', space=smem, size = 0x4, offset = 0x4, fixed_abs, tag = 'smem constant byte address 0x4 - core index']
  #allocation1 [shape = 'u32[144,128]{1,0:T(1,128)}', space=vmem, size = 0x12000, scoped, tag = 'internal scratch']
  #allocation2 [shape = 'f32[64,384]{1,0:T(8,128)}', space=vmem, size = 0x18000, scoped, tag = 'scratch operand']
  #allocation3 [shape = 's32[1]{0}', space=sflag, size = 0x4, scoped, tag = 'scoped memory for tpu_custom_call.1']
  #allocation4 [shape = 'u8[512]{0}', space=smem, size = 0x200, scoped, tag = 'prefetched SMEM operand 0']
  %s0 = inlined_call_operand.vmem [shape: s32[64], index: 0, kind: input, shape index: {}]
  %s1 = inlined_call_operand.vmem [shape: s32[8,1], index: 1, kind: input, shape index: {}]
  %s2 = inlined_call_operand.hbm [shape: f32[16,384], index: 2, kind: input, shape index: {}]
  %s3 = inlined_call_operand.hbm [shape: bf16[128,384], index: 3, kind: input, shape index: {}]
  %s4 = inlined_call_operand.vmem [shape: f32[1,128], index: 4, kind: input, shape index: {}]
  %s5 = inlined_call_operand.hbm [shape: bf16[128,128], index: 5, kind: input, shape index: {}]
  %s6 = inlined_call_operand.vmem [shape: f32[1,128], index: 6, kind: input, shape index: {}]
  %s7 = inlined_call_operand.hbm [shape: f32[8,128], index: 7, kind: output, shape index: {}]
  %s8 = sld [smem:[#allocation0]]
  $region53: #{tpu_custom_call.1} parent=0
    _
  %s10 = ssub.s32 1, %s8
  %s11 = scalar_select 0, %s10, %s8
  %s12 = sshll.u32 %s0, 4
  %s13 = int_to_ptr.vmem [resolvable:$true] %s12
  %15 = dma.vmem_to_smem %s13, 16, [#allocation4], [#allocation3]
  %16 = dma.done [#allocation3], 16
  %17 = sfence
  $region1: #{tpu_custom_call.1} parent=0
    #allocation5 [shape = 'u8[24576]{0}', space=vmem, size = 0x6000, scoped, tag = 'input window, operand 2, single buffered']
    #allocation6 [shape = 's32[1]{0}', space=sflag, size = 0x4, scoped, tag = 'scoped memory for tpu_custom_call.1']
    #allocation7 [shape = 's32[1]{0}', space=sflag, size = 0x4, scoped, tag = 'scoped memory for tpu_custom_call.1']
    #allocation8 [shape = 'u8[98304]{0}', space=vmem, size = 0x18000, scoped, tag = 'input window, operand 3, single buffered']
    #allocation9 [shape = 's32[1]{0}', space=sflag, size = 0x4, scoped, tag = 'scoped memory for tpu_custom_call.1']
    #allocation10 [shape = 'u8[32768]{0}', space=vmem, size = 0x8000, scoped, tag = 'input window, operand 5, single buffered']
    #allocation11 [shape = 'u8[4096]{0}', space=vmem, size = 0x1000, scoped, tag = 'output window, operand 0, single buffered']
    %18 = vsyncpa [#allocation6], 0
    %19 = vsyncpa [#allocation9], 0
    %20 = vsyncpa [#allocation7], 0
    // Predicated region
    $region2: #{tpu_custom_call.1} parent=1 // pred_check
      _
    $region3: #{tpu_custom_call.1} parent=1 // pred_check_branch
      %22 = sbr.rel (0) target = $region5
    $region4: #{tpu_custom_call.1} parent=1 // pred_region
      _
    $region5: #{tpu_custom_call.1} parent=1 // pred_fallthru
      _
    // Predicated region
    $region6: #{tpu_custom_call.1} parent=1 // pred_check
      _
    $region7: #{tpu_custom_call.1} parent=1 // pred_check_branch
      %24 = sbr.rel (0) target = $region9
    $region8: #{tpu_custom_call.1} parent=1 // pred_region
      %s26 = ssub.s32 768, 768
      %27 = vsyncadd [#allocation6], %s26
      %s28 = sshll.u32 [#allocation5], 4
      %s29 = int_to_ptr.vmem [resolvable:$true] %s28
      %34 = dma.hbm_to_vmem [thread:$0]  %s2, 768, %s29, [#allocation6], 384, 384, 24
    $region9: #{tpu_custom_call.1} parent=1 // pred_fallthru
      _
    // Predicated region
    $region10: #{tpu_custom_call.1} parent=1 // pred_check
      _
    $region11: #{tpu_custom_call.1} parent=1 // pred_check_branch
      %36 = sbr.rel (0) target = $region13
    $region12: #{tpu_custom_call.1} parent=1 // pred_region
      %s38 = ssub.s32 3072, 3072
      %39 = vsyncadd [#allocation9], %s38
      %s40 = sshll.u32 [#allocation8], 4
      %s41 = int_to_ptr.vmem [resolvable:$true] %s40
      %46 = dma.hbm_to_vmem [thread:$0]  %s3, 3072, %s41, [#allocation9], 192, 192, 12
    $region13: #{tpu_custom_call.1} parent=1 // pred_fallthru
      _
    // Predicated region
    $region14: #{tpu_custom_call.1} parent=1 // pred_check
      _
    $region15: #{tpu_custom_call.1} parent=1 // pred_check_branch
      %48 = sbr.rel (0) target = $region17
    $region16: #{tpu_custom_call.1} parent=1 // pred_region
      _
    $region17: #{tpu_custom_call.1} parent=1 // pred_fallthru
      _
    // Predicated region
    $region18: #{tpu_custom_call.1} parent=1 // pred_check
      _
    $region19: #{tpu_custom_call.1} parent=1 // pred_check_branch
      %50 = sbr.rel (0) target = $region21
    $region20: #{tpu_custom_call.1} parent=1 // pred_region
      %s52 = ssub.s32 1024, 1024
      %53 = vsyncadd [#allocation9], %s52
      %s54 = sshll.u32 [#allocation10], 4
      %s55 = int_to_ptr.vmem [resolvable:$true] %s54
      %60 = dma.hbm_to_vmem [thread:$0]  %s5, 1024, %s55, [#allocation9], 64, 64, 4
    $region21: #{tpu_custom_call.1} parent=1 // pred_fallthru
      _
    // Predicated region
    $region22: #{tpu_custom_call.1} parent=1 // pred_check
      _
    $region23: #{tpu_custom_call.1} parent=1 // pred_check_branch
      %62 = sbr.rel (0) target = $region25
    $region24: #{tpu_custom_call.1} parent=1 // pred_region
      _
    $region25: #{tpu_custom_call.1} parent=1 // pred_fallthru
      _
    // Predicated region
    $region26: #{tpu_custom_call.1} parent=1 // pred_check
      _
    $region27: #{tpu_custom_call.1} parent=1 // pred_check_branch
      %64 = sbr.rel (0) target = $region29
    $region28: #{tpu_custom_call.1} parent=1 // pred_region
      %65 = dma.done [#allocation6], 768
    $region29: #{tpu_custom_call.1} parent=1 // pred_fallthru
      _
    // Predicated region
    $region30: #{tpu_custom_call.1} parent=1 // pred_check
      _
    $region31: #{tpu_custom_call.1} parent=1 // pred_check_branch
      %67 = sbr.rel (0) target = $region33
    $region32: #{tpu_custom_call.1} parent=1 // pred_region
      %68 = dma.done [#allocation9], 3072
    $region33: #{tpu_custom_call.1} parent=1 // pred_fallthru
      _
    // Predicated region
    $region34: #{tpu_custom_call.1} parent=1 // pred_check
      _
    $region35: #{tpu_custom_call.1} parent=1 // pred_check_branch
      %70 = sbr.rel (0) target = $region37
    $region36: #{tpu_custom_call.1} parent=1 // pred_region
      %71 = dma.done [#allocation9], 1024
    $region37: #{tpu_custom_call.1} parent=1 // pred_fallthru
      _
    %s73 = smul.u32 0, 64
    loop: start=0, step=1, limit=64
    $region38: #{tpu_custom_call.1} parent=1 // loop_pre_header
      _
    $region39: #{tpu_custom_call.1} parent=1 // loop_header
      %s75 = sphi 0, %s79
      %p76 = scmp.ge.s32.totalorder %s75, 64
    $region40: #{tpu_custom_call.1} parent=1 // loop_header_branch
      %78 = sbr.rel (%p76) target = $region44
    $region41: #{tpu_custom_call.1} parent=1 // loop_body
      %s80 = sadd.s32 %s73, %s75
      %s81 = sld [smem:[#allocation4 + %s80]]
      %s82 = sshra.s32 %s81, 3
      %s83 = sand.u32 %s81, 7
      %s84 = sshra.s32 %s81, 3
      %s85 = sand.u32 %s81, 7
      %s86 = smul.u32 %s82, 3
      %s87 = smul.u32 %s86, 8
      %s88 = sadd.s32 %s87, %s85
      %s89 = scalar_lea.vmem [#allocation5], %s88
      %v90 = vld [vmem:[%s89] ss:$8 sm:$0x7]
      %v91 = vlaneseq
      %vm92 = vcmp.ge.s32.totalorder %v91, 0
      %vm93 = vcmp.lt.s32.totalorder %v91, 384
      %vm94 = vmand %vm92, %vm93
      %s95 = sshra.s32 %s75, 3
      %s96 = sand.u32 %s75, 7
      %s97 = sshra.s32 %s75, 3
      %s98 = sand.u32 %s75, 7
      %s99 = smul.u32 %s95, 3
      %s100 = smul.u32 %s99, 8
      %s101 = sadd.s32 %s100, %s98
      %s102 = scalar_lea.vmem [#allocation2], %s101
      %103 = vst.msk [vmem:[%s102] ss:$8 sm:$0x7] %vm94, %v90
      %104 = vst.msk [vmem:[%s102] ss:$8 sm:$0x0] %vm94, %v90
    $region42: #{tpu_custom_call.1} parent=1 // loop_footer
      %s79 = sadd.s32 1, %s75
    $region43: #{tpu_custom_call.1} parent=1 // loop_footer_branch
      %74 = sbr.rel target = $region39
    $region44: #{tpu_custom_call.1} parent=1 // loop_exit
      _
    %v105 = vld [vmem:[%s4] sm:$0x1]
    %v107 = vlaneseq
    %v108 = vshrl.u32 %v107, 7
    %v109 = vsub.s32 0, %v108
    %v110 = vrot.slane %v105, %v109
    %v112 = vld [vmem:[%s1] sm:$0xff]
    %s113 = smul.u32 0, 3
    %s114 = smul.addr %s113, 8
    %s115 = scalar_lea.vmem [#allocation2], %s114
    %v116 = vld [vmem:[%s115] sm:$0xff]
    %v117 = vld [vmem:[%s115 + $0x8] sm:$0xff]
    %v118 = vld [vmem:[%s115 + $0x10] sm:$0xff]
    %v119 = vld [vmem:[#allocation8] sm:$0xff]
    %v120 = vld [vmem:[#allocation8 + $0x8] sm:$0xf]
    %v121 = vld [vmem:[#allocation8 + $0xc] sm:$0xff]
    %v122 = vld [vmem:[#allocation8 + $0x14] sm:$0xf]
    %v123 = vld [vmem:[#allocation8 + $0x18] sm:$0xff]
    %v124 = vld [vmem:[#allocation8 + $0x20] sm:$0xf]
    %v125 = vld [vmem:[#allocation8 + $0x24] sm:$0xff]
    %v126 = vld [vmem:[#allocation8 + $0x2c] sm:$0xf]
    %v127 = vld [vmem:[#allocation8 + $0x30] sm:$0xff]
    %v128 = vld [vmem:[#allocation8 + $0x38] sm:$0xf]
    %v129 = vld [vmem:[#allocation8 + $0x3c] sm:$0xff]
    %v130 = vld [vmem:[#allocation8 + $0x44] sm:$0xf]
    %v131 = vld [vmem:[#allocation8 + $0x48] sm:$0xff]
    %v132 = vld [vmem:[#allocation8 + $0x50] sm:$0xf]
    %v133 = vld [vmem:[#allocation8 + $0x54] sm:$0xff]
    %v134 = vld [vmem:[#allocation8 + $0x5c] sm:$0xf]
    %v135 = vld [vmem:[#allocation8 + $0x60] sm:$0xff]
    %v136 = vld [vmem:[#allocation8 + $0x68] sm:$0xf]
    %v137 = vld [vmem:[#allocation8 + $0x6c] sm:$0xff]
    %v138 = vld [vmem:[#allocation8 + $0x74] sm:$0xf]
    %v139 = vld [vmem:[#allocation8 + $0x78] sm:$0xff]
    %v140 = vld [vmem:[#allocation8 + $0x80] sm:$0xf]
    %v141 = vld [vmem:[#allocation8 + $0x84] sm:$0xff]
    %v142 = vld [vmem:[#allocation8 + $0x8c] sm:$0xf]
    %v143 = vld [vmem:[#allocation8 + $0x90] sm:$0xff]
    %v144 = vld [vmem:[#allocation8 + $0x98] sm:$0xf]
    %v145 = vld [vmem:[#allocation8 + $0x9c] sm:$0xff]
    %v146 = vld [vmem:[#allocation8 + $0xa4] sm:$0xf]
    %v147 = vld [vmem:[#allocation8 + $0xa8] sm:$0xff]
    %v148 = vld [vmem:[#allocation8 + $0xb0] sm:$0xf]
    %v149 = vld [vmem:[#allocation8 + $0xb4] sm:$0xff]
    %v150 = vld [vmem:[#allocation8 + $0xbc] sm:$0xf]
    %v183 = vunpack.c.l.b16 %v119
    %v184 = vunpack.c.h.b16 %v119
    %v185 = vunpack.c.l.b16 %v120
    %v186 = vunpack.c.l.b16 %v121
    %v187 = vunpack.c.h.b16 %v121
    %v188 = vunpack.c.l.b16 %v122
    %v189 = vunpack.c.l.b16 %v123
    %v190 = vunpack.c.h.b16 %v123
    %v191 = vunpack.c.l.b16 %v124
    %v192 = vunpack.c.l.b16 %v125
    %v193 = vunpack.c.h.b16 %v125
    %v194 = vunpack.c.l.b16 %v126
    %v195 = vunpack.c.l.b16 %v127
    %v196 = vunpack.c.h.b16 %v127
    %v197 = vunpack.c.l.b16 %v128
    %v198 = vunpack.c.l.b16 %v129
    %v199 = vunpack.c.h.b16 %v129
    %v200 = vunpack.c.l.b16 %v130
    %v201 = vunpack.c.l.b16 %v131
    %v202 = vunpack.c.h.b16 %v131
    %v203 = vunpack.c.l.b16 %v132
    %v204 = vunpack.c.l.b16 %v133
    %v205 = vunpack.c.h.b16 %v133
    %v206 = vunpack.c.l.b16 %v134
    %v207 = vunpack.c.l.b16 %v135
    %v208 = vunpack.c.h.b16 %v135
    %v209 = vunpack.c.l.b16 %v136
    %v210 = vunpack.c.l.b16 %v137
    %v211 = vunpack.c.h.b16 %v137
    %v212 = vunpack.c.l.b16 %v138
    %v213 = vunpack.c.l.b16 %v139
    %v214 = vunpack.c.h.b16 %v139
    %v215 = vunpack.c.l.b16 %v140
    %v216 = vunpack.c.l.b16 %v141
    %v217 = vunpack.c.h.b16 %v141
    %v218 = vunpack.c.l.b16 %v142
    %v219 = vunpack.c.l.b16 %v143
    %v220 = vunpack.c.h.b16 %v143
    %v221 = vunpack.c.l.b16 %v144
    %v222 = vunpack.c.l.b16 %v145
    %v223 = vunpack.c.h.b16 %v145
    %v224 = vunpack.c.l.b16 %v146
    %v225 = vunpack.c.l.b16 %v147
    %v226 = vunpack.c.h.b16 %v147
    %v227 = vunpack.c.l.b16 %v148
    %v228 = vunpack.c.l.b16 %v149
    %v229 = vunpack.c.h.b16 %v149
    %v230 = vunpack.c.l.b16 %v150
    %v231 = vpack.c.b16 %v186, %v183
    %v232 = vpack.c.b16 %v187, %v184
    %v233 = vpack.c.b16 %v188, %v185
    %v234 = vpack.c.b16 %v192, %v189
    %v235 = vpack.c.b16 %v193, %v190
    %v236 = vpack.c.b16 %v194, %v191
    %v237 = vpack.c.b16 %v198, %v195
    %v238 = vpack.c.b16 %v199, %v196
    %v239 = vpack.c.b16 %v200, %v197
    %v240 = vpack.c.b16 %v204, %v201
    %v241 = vpack.c.b16 %v205, %v202
    %v242 = vpack.c.b16 %v206, %v203
    %v243 = vpack.c.b16 %v210, %v207
    %v244 = vpack.c.b16 %v211, %v208
    %v245 = vpack.c.b16 %v212, %v209
    %v246 = vpack.c.b16 %v216, %v213
    %v247 = vpack.c.b16 %v217, %v214
    %v248 = vpack.c.b16 %v218, %v215
    %v249 = vpack.c.b16 %v222, %v219
    %v250 = vpack.c.b16 %v223, %v220
    %v251 = vpack.c.b16 %v224, %v221
    %v252 = vpack.c.b16 %v228, %v225
    %v253 = vpack.c.b16 %v229, %v226
    %v254 = vpack.c.b16 %v230, %v227
    %279 = vmatprep.subr.bf16.mxu0 %v232
    %280 = vmatpush1.bf16.msra.mxu0 %v231
    %281 = vmatprep.subr.bf16.mxu0 %v235
    %282 = vmatpush1.bf16.msra.mxu0 %v234
    %283 = vmatprep.subr.bf16.mxu0 %v238
    %284 = vmatpush1.bf16.msra.mxu0 %v237
    %285 = vmatprep.subr.bf16.mxu0 %v241
    %286 = vmatpush1.bf16.msra.mxu0 %v240
    %287 = vmatprep.subr.bf16.mxu0 %v244
    %288 = vmatpush1.bf16.msra.mxu0 %v243
    %289 = vmatprep.subr.bf16.mxu0 %v247
    %290 = vmatpush1.bf16.msra.mxu0 %v246
    %291 = vmatprep.subr.bf16.mxu0 %v250
    %292 = vmatpush1.bf16.msra.mxu0 %v249
    %293 = vmatprep.subr.bf16.mxu0 %v253
    %294 = vmatpush1.bf16.msra.mxu0 %v252
    %295 = vmatprep.subr.bf16.mxu0 0
    %296 = vmatpush1.bf16.msra.mxu0 0
    %297 = vmatprep.subr.bf16.mxu0 0
    %298 = vmatpush1.bf16.msra.mxu0 0
    %299 = vmatprep.subr.bf16.mxu0 0
    %300 = vmatpush1.bf16.msra.mxu0 0
    %301 = vmatprep.subr.bf16.mxu0 0
    %302 = vmatpush1.bf16.msra.mxu0 0
    %303 = vmatprep.subr.bf16.mxu0 0
    %304 = vmatpush1.bf16.msra.mxu0 0
    %305 = vmatprep.subr.bf16.mxu0 0
    %306 = vmatpush1.bf16.msra.mxu0 0
    %307 = vmatprep.subr.bf16.mxu0 0
    %308 = vmatpush1.bf16.msra.mxu0 0
    %309 = vmatprep.subr.bf16.mxu0 0
    %310 = vmatpush1.bf16.msra.mxu0 0
    %311 = vmatprep.mubr.bf16.mxu0 0
    %312 = vmatmul.mubr.bf16.gmra.mrb[0].mxu0 0
    %v313 = vpop.f32.mrb[0].mxu0
    %v314 = vadd.f32 0.0, %v313
    %v315 = vpop.f32.mrb[0].mxu0
    %v316 = vadd.f32 0.0, %v315
    %v317 = vpop.f32.mrb[0].mxu0
    %v318 = vpop.f32.mrb[0].mxu0
    %319 = vdwg.mxu0
    %320 = vmatprep.subr.bf16.mxu0 0
    %321 = vmatpush1.bf16.msra.mxu0 %v233
    %322 = vmatprep.subr.bf16.mxu0 0
    %323 = vmatpush1.bf16.msra.mxu0 %v236
    %324 = vmatprep.subr.bf16.mxu0 0
    %325 = vmatpush1.bf16.msra.mxu0 %v239
    %326 = vmatprep.subr.bf16.mxu0 0
    %327 = vmatpush1.bf16.msra.mxu0 %v242
    %328 = vmatprep.subr.bf16.mxu0 0
    %329 = vmatpush1.bf16.msra.mxu0 %v245
    %330 = vmatprep.subr.bf16.mxu0 0
    %331 = vmatpush1.bf16.msra.mxu0 %v248
    %332 = vmatprep.subr.bf16.mxu0 0
    %333 = vmatpush1.bf16.msra.mxu0 %v251
    %334 = vmatprep.subr.bf16.mxu0 0
    %335 = vmatpush1.bf16.msra.mxu0 %v254
    %336 = vmatprep.subr.bf16.mxu0 0
    %337 = vmatpush1.bf16.msra.mxu0 0
    %338 = vmatprep.subr.bf16.mxu0 0
    %339 = vmatpush1.bf16.msra.mxu0 0
    %340 = vmatprep.subr.bf16.mxu0 0
    %341 = vmatpush1.bf16.msra.mxu0 0
    %342 = vmatprep.subr.bf16.mxu0 0
    %343 = vmatpush1.bf16.msra.mxu0 0
    %344 = vmatprep.subr.bf16.mxu0 0
    %345 = vmatpush1.bf16.msra.mxu0 0
    %346 = vmatprep.subr.bf16.mxu0 0
    %347 = vmatpush1.bf16.msra.mxu0 0
    %348 = vmatprep.subr.bf16.mxu0 0
    %349 = vmatpush1.bf16.msra.mxu0 0
    %350 = vmatprep.subr.bf16.mxu0 0
    %351 = vmatpush1.bf16.msra.mxu0 0
    %352 = vmatprep.mubr.bf16.mxu0 0
    %353 = vmatmul.mubr.bf16.gmra.mrb[0].mxu0 0
    %v354 = vpop.f32.mrb[0].mxu0
    %v355 = vadd.f32 0.0, %v354
    %v356 = vpop.f32.mrb[0].mxu0
    %v357 = vpop.f32.mrb[0].mxu0
    %v358 = vpop.f32.mrb[0].mxu0
    %359 = vdwg.mxu0
    %v360 = vadd.f32 %v116, %v314
    %v361 = vxor.u32 %v360, 2147483648
    %v362 = vmul.f32 %v361, 1.442695
    %v363 = vpow.pop %v362
    %v364 = vadd.f32 %v363, 1.0
    %v365 = vrcp.pop %v364
    %v366 = vmul.f32 1.0, %v365
    %v367 = vadd.f32 %v117, %v316
    %v368 = vxor.u32 %v367, 2147483648
    %v369 = vmul.f32 %v368, 1.442695
    %v370 = vpow.pop %v369
    %v371 = vadd.f32 %v370, 1.0
    %v372 = vrcp.pop %v371
    %v373 = vmul.f32 1.0, %v372
    %v374 = vadd.f32 %v355, %v110
    %v375 = vmul.f32 %v366, %v374
    %v376 = vadd.f32 %v118, %v375
    %v377 = vtanh.pop %v376
    %v378 = vsub.f32 0.0, %v377
    %v379 = vmul.f32 %v373, %v378
    %v380 = vadd.f32 %v377, %v379
    %vm381 = vcmp.gt.s32.totalorder %v112, 0
    %v382 = vsel %vm381, 1, 0
    %383 = vset.pattern.permute.xlu0 0
    %384 = vperm.xlu0 %383, %v382
    %v385 = vpop.permute.xlu0 %384
    %vm386 = vcmp.eq.s32.totalorder %v385, 1
    %v387 = vsel %vm386, %v380, 0.0
    %s388 = smul.u32 1, 3
    %s389 = smul.addr %s388, 8
    %s390 = scalar_lea.vmem [#allocation2], %s389
    %v391 = vld [vmem:[%s390] sm:$0xff]
    %v392 = vld [vmem:[%s390 + $0x8] sm:$0xff]
    %v393 = vld [vmem:[%s390 + $0x10] sm:$0xff]
    %v394 = vpack.c.bf16 %v387, %v387
    %395 = vmatprep.subr.bf16.mxu0 %v232
    %396 = vmatpush1.bf16.msra.mxu0 %v231
    %397 = vmatprep.subr.bf16.mxu0 %v235
    %398 = vmatpush1.bf16.msra.mxu0 %v234
    %399 = vmatprep.subr.bf16.mxu0 %v238
    %400 = vmatpush1.bf16.msra.mxu0 %v237
    %401 = vmatprep.subr.bf16.mxu0 %v241
    %402 = vmatpush1.bf16.msra.mxu0 %v240
    %403 = vmatprep.subr.bf16.mxu0 %v244
    %404 = vmatpush1.bf16.msra.mxu0 %v243
    %405 = vmatprep.subr.bf16.mxu0 %v247
    %406 = vmatpush1.bf16.msra.mxu0 %v246
    %407 = vmatprep.subr.bf16.mxu0 %v250
    %408 = vmatpush1.bf16.msra.mxu0 %v249
    %409 = vmatprep.subr.bf16.mxu0 %v253
    %410 = vmatpush1.bf16.msra.mxu0 %v252
    %411 = vmatprep.subr.bf16.mxu0 0
    %412 = vmatpush1.bf16.msra.mxu0 0
    %413 = vmatprep.subr.bf16.mxu0 0
    %414 = vmatpush1.bf16.msra.mxu0 0
    %415 = vmatprep.subr.bf16.mxu0 0
    %416 = vmatpush1.bf16.msra.mxu0 0
    %417 = vmatprep.subr.bf16.mxu0 0
    %418 = vmatpush1.bf16.msra.mxu0 0
    %419 = vmatprep.subr.bf16.mxu0 0
    %420 = vmatpush1.bf16.msra.mxu0 0
    %421 = vmatprep.subr.bf16.mxu0 0
    %422 = vmatpush1.bf16.msra.mxu0 0
    %423 = vmatprep.subr.bf16.mxu0 0
    %424 = vmatpush1.bf16.msra.mxu0 0
    %425 = vmatprep.subr.bf16.mxu0 0
    %426 = vmatpush1.bf16.msra.mxu0 0
    %427 = vmatprep.mubr.bf16.mxu0 0
    %428 = vmatmul.mubr.bf16.gmra.mrb[0].mxu0 %v394
    %v429 = vpop.f32.mrb[0].mxu0
    %v430 = vadd.f32 0.0, %v429
    %v431 = vpop.f32.mrb[0].mxu0
    %v432 = vadd.f32 0.0, %v431
    %v433 = vpop.f32.mrb[0].mxu0
    %v434 = vpop.f32.mrb[0].mxu0
    %435 = vdwg.mxu0
    %436 = vmatprep.subr.bf16.mxu0 0
    %437 = vmatpush1.bf16.msra.mxu0 %v233
    %438 = vmatprep.subr.bf16.mxu0 0
    %439 = vmatpush1.bf16.msra.mxu0 %v236
    %440 = vmatprep.subr.bf16.mxu0 0
    %441 = vmatpush1.bf16.msra.mxu0 %v239
    %442 = vmatprep.subr.bf16.mxu0 0
    %443 = vmatpush1.bf16.msra.mxu0 %v242
    %444 = vmatprep.subr.bf16.mxu0 0
    %445 = vmatpush1.bf16.msra.mxu0 %v245
    %446 = vmatprep.subr.bf16.mxu0 0
    %447 = vmatpush1.bf16.msra.mxu0 %v248
    %448 = vmatprep.subr.bf16.mxu0 0
    %449 = vmatpush1.bf16.msra.mxu0 %v251
    %450 = vmatprep.subr.bf16.mxu0 0
    %451 = vmatpush1.bf16.msra.mxu0 %v254
    %452 = vmatprep.subr.bf16.mxu0 0
    %453 = vmatpush1.bf16.msra.mxu0 0
    %454 = vmatprep.subr.bf16.mxu0 0
    %455 = vmatpush1.bf16.msra.mxu0 0
    %456 = vmatprep.subr.bf16.mxu0 0
    %457 = vmatpush1.bf16.msra.mxu0 0
    %458 = vmatprep.subr.bf16.mxu0 0
    %459 = vmatpush1.bf16.msra.mxu0 0
    %460 = vmatprep.subr.bf16.mxu0 0
    %461 = vmatpush1.bf16.msra.mxu0 0
    %462 = vmatprep.subr.bf16.mxu0 0
    %463 = vmatpush1.bf16.msra.mxu0 0
    %464 = vmatprep.subr.bf16.mxu0 0
    %465 = vmatpush1.bf16.msra.mxu0 0
    %466 = vmatprep.subr.bf16.mxu0 0
    %467 = vmatpush1.bf16.msra.mxu0 0
    %468 = vmatprep.mubr.bf16.mxu0 0
    %469 = vmatmul.mubr.bf16.gmra.mrb[0].mxu0 %v394
    %v470 = vpop.f32.mrb[0].mxu0
    %v471 = vadd.f32 0.0, %v470
    %v472 = vpop.f32.mrb[0].mxu0
    %v473 = vpop.f32.mrb[0].mxu0
    %v474 = vpop.f32.mrb[0].mxu0
    %475 = vdwg.mxu0
    %v476 = vadd.f32 %v391, %v430
    %v477 = vxor.u32 %v476, 2147483648
    %v478 = vmul.f32 %v477, 1.442695
    %v479 = vpow.pop %v478
    %v480 = vadd.f32 %v479, 1.0
    %v481 = vrcp.pop %v480
    %v482 = vmul.f32 1.0, %v481
    %v483 = vadd.f32 %v392, %v432
    %v484 = vxor.u32 %v483, 2147483648
    %v485 = vmul.f32 %v484, 1.442695
    %v486 = vpow.pop %v485
    %v487 = vadd.f32 %v486, 1.0
    %v488 = vrcp.pop %v487
    %v489 = vmul.f32 1.0, %v488
    %v490 = vadd.f32 %v471, %v110
    %v491 = vmul.f32 %v482, %v490
    %v492 = vadd.f32 %v393, %v491
    %v493 = vtanh.pop %v492
    %v494 = vsub.f32 %v387, %v493
    %v495 = vmul.f32 %v489, %v494
    %v496 = vadd.f32 %v493, %v495
    %vm497 = vcmp.gt.s32.totalorder %v112, 1
    %v498 = vsel %vm497, 1, 0
    %499 = vset.pattern.permute.xlu0 0
    %500 = vperm.xlu0 %499, %v498
    %v501 = vpop.permute.xlu0 %500
    %vm502 = vcmp.eq.s32.totalorder %v501, 1
    %v503 = vsel %vm502, %v496, %v387
    %s504 = smul.u32 2, 3
    %s505 = smul.addr %s504, 8
    %s506 = scalar_lea.vmem [#allocation2], %s505
    %v507 = vld [vmem:[%s506] sm:$0xff]
    %v508 = vld [vmem:[%s506 + $0x8] sm:$0xff]
    %v509 = vld [vmem:[%s506 + $0x10] sm:$0xff]
    %v510 = vpack.c.bf16 %v503, %v503
    %511 = vmatprep.subr.bf16.mxu0 %v232
    %512 = vmatpush1.bf16.msra.mxu0 %v231
    %513 = vmatprep.subr.bf16.mxu0 %v235
    %514 = vmatpush1.bf16.msra.mxu0 %v234
    %515 = vmatprep.subr.bf16.mxu0 %v238
    %516 = vmatpush1.bf16.msra.mxu0 %v237
    %517 = vmatprep.subr.bf16.mxu0 %v241
    %518 = vmatpush1.bf16.msra.mxu0 %v240
    %519 = vmatprep.subr.bf16.mxu0 %v244
    %520 = vmatpush1.bf16.msra.mxu0 %v243
    %521 = vmatprep.subr.bf16.mxu0 %v247
    %522 = vmatpush1.bf16.msra.mxu0 %v246
    %523 = vmatprep.subr.bf16.mxu0 %v250
    %524 = vmatpush1.bf16.msra.mxu0 %v249
    %525 = vmatprep.subr.bf16.mxu0 %v253
    %526 = vmatpush1.bf16.msra.mxu0 %v252
    %527 = vmatprep.subr.bf16.mxu0 0
    %528 = vmatpush1.bf16.msra.mxu0 0
    %529 = vmatprep.subr.bf16.mxu0 0
    %530 = vmatpush1.bf16.msra.mxu0 0
    %531 = vmatprep.subr.bf16.mxu0 0
    %532 = vmatpush1.bf16.msra.mxu0 0
    %533 = vmatprep.subr.bf16.mxu0 0
    %534 = vmatpush1.bf16.msra.mxu0 0
    %535 = vmatprep.subr.bf16.mxu0 0
    %536 = vmatpush1.bf16.msra.mxu0 0
    %537 = vmatprep.subr.bf16.mxu0 0
    %538 = vmatpush1.bf16.msra.mxu0 0
    %539 = vmatprep.subr.bf16.mxu0 0
    %540 = vmatpush1.bf16.msra.mxu0 0
    %541 = vmatprep.subr.bf16.mxu0 0
    %542 = vmatpush1.bf16.msra.mxu0 0
    %543 = vmatprep.mubr.bf16.mxu0 0
    %544 = vmatmul.mubr.bf16.gmra.mrb[0].mxu0 %v510
    %v545 = vpop.f32.mrb[0].mxu0
    %v546 = vadd.f32 0.0, %v545
    %v547 = vpop.f32.mrb[0].mxu0
    %v548 = vadd.f32 0.0, %v547
    %v549 = vpop.f32.mrb[0].mxu0
    %v550 = vpop.f32.mrb[0].mxu0
    %551 = vdwg.mxu0
    %552 = vmatprep.subr.bf16.mxu0 0
    %553 = vmatpush1.bf16.msra.mxu0 %v233
    %554 = vmatprep.subr.bf16.mxu0 0
    %555 = vmatpush1.bf16.msra.mxu0 %v236
    %556 = vmatprep.subr.bf16.mxu0 0
    %557 = vmatpush1.bf16.msra.mxu0 %v239
    %558 = vmatprep.subr.bf16.mxu0 0
    %559 = vmatpush1.bf16.msra.mxu0 %v242
    %560 = vmatprep.subr.bf16.mxu0 0
    %561 = vmatpush1.bf16.msra.mxu0 %v245
    %562 = vmatprep.subr.bf16.mxu0 0
    %563 = vmatpush1.bf16.msra.mxu0 %v248
    %564 = vmatprep.subr.bf16.mxu0 0
    %565 = vmatpush1.bf16.msra.mxu0 %v251
    %566 = vmatprep.subr.bf16.mxu0 0
    %567 = vmatpush1.bf16.msra.mxu0 %v254
    %568 = vmatprep.subr.bf16.mxu0 0
    %569 = vmatpush1.bf16.msra.mxu0 0
    %570 = vmatprep.subr.bf16.mxu0 0
    %571 = vmatpush1.bf16.msra.mxu0 0
    %572 = vmatprep.subr.bf16.mxu0 0
    %573 = vmatpush1.bf16.msra.mxu0 0
    %574 = vmatprep.subr.bf16.mxu0 0
    %575 = vmatpush1.bf16.msra.mxu0 0
    %576 = vmatprep.subr.bf16.mxu0 0
    %577 = vmatpush1.bf16.msra.mxu0 0
    %578 = vmatprep.subr.bf16.mxu0 0
    %579 = vmatpush1.bf16.msra.mxu0 0
    %580 = vmatprep.subr.bf16.mxu0 0
    %581 = vmatpush1.bf16.msra.mxu0 0
    %582 = vmatprep.subr.bf16.mxu0 0
    %583 = vmatpush1.bf16.msra.mxu0 0
    %584 = vmatprep.mubr.bf16.mxu0 0
    %585 = vmatmul.mubr.bf16.gmra.mrb[0].mxu0 %v510
    %v586 = vpop.f32.mrb[0].mxu0
    %v587 = vadd.f32 0.0, %v586
    %v588 = vpop.f32.mrb[0].mxu0
    %v589 = vpop.f32.mrb[0].mxu0
    %v590 = vpop.f32.mrb[0].mxu0
    %591 = vdwg.mxu0
    %v592 = vadd.f32 %v507, %v546
    %v593 = vxor.u32 %v592, 2147483648
    %v594 = vmul.f32 %v593, 1.442695
    %v595 = vpow.pop %v594
    %v596 = vadd.f32 %v595, 1.0
    %v597 = vrcp.pop %v596
    %v598 = vmul.f32 1.0, %v597
    %v599 = vadd.f32 %v508, %v548
    %v600 = vxor.u32 %v599, 2147483648
    %v601 = vmul.f32 %v600, 1.442695
    %v602 = vpow.pop %v601
    %v603 = vadd.f32 %v602, 1.0
    %v604 = vrcp.pop %v603
    %v605 = vmul.f32 1.0, %v604
    %v606 = vadd.f32 %v587, %v110
    %v607 = vmul.f32 %v598, %v606
    %v608 = vadd.f32 %v509, %v607
    %v609 = vtanh.pop %v608
    %v610 = vsub.f32 %v503, %v609
    %v611 = vmul.f32 %v605, %v610
    %v612 = vadd.f32 %v609, %v611
    %vm613 = vcmp.gt.s32.totalorder %v112, 2
    %v614 = vsel %vm613, 1, 0
    %615 = vset.pattern.permute.xlu0 0
    %616 = vperm.xlu0 %615, %v614
    %v617 = vpop.permute.xlu0 %616
    %vm618 = vcmp.eq.s32.totalorder %v617, 1
    %v619 = vsel %vm618, %v612, %v503
    %s620 = smul.u32 3, 3
    %s621 = smul.addr %s620, 8
    %s622 = scalar_lea.vmem [#allocation2], %s621
    %v623 = vld [vmem:[%s622] sm:$0xff]
    %v624 = vld [vmem:[%s622 + $0x8] sm:$0xff]
    %v625 = vld [vmem:[%s622 + $0x10] sm:$0xff]
    %v626 = vpack.c.bf16 %v619, %v619
    %627 = vmatprep.subr.bf16.mxu0 %v232
    %628 = vmatpush1.bf16.msra.mxu0 %v231
    %629 = vmatprep.subr.bf16.mxu0 %v235
    %630 = vmatpush1.bf16.msra.mxu0 %v234
    %631 = vmatprep.subr.bf16.mxu0 %v238
    %632 = vmatpush1.bf16.msra.mxu0 %v237
    %633 = vmatprep.subr.bf16.mxu0 %v241
    %634 = vmatpush1.bf16.msra.mxu0 %v240
    %635 = vmatprep.subr.bf16.mxu0 %v244
    %636 = vmatpush1.bf16.msra.mxu0 %v243
    %637 = vmatprep.subr.bf16.mxu0 %v247
    %638 = vmatpush1.bf16.msra.mxu0 %v246
    %639 = vmatprep.subr.bf16.mxu0 %v250
    %640 = vmatpush1.bf16.msra.mxu0 %v249
    %641 = vmatprep.subr.bf16.mxu0 %v253
    %642 = vmatpush1.bf16.msra.mxu0 %v252
    %643 = vmatprep.subr.bf16.mxu0 0
    %644 = vmatpush1.bf16.msra.mxu0 0
    %645 = vmatprep.subr.bf16.mxu0 0
    %646 = vmatpush1.bf16.msra.mxu0 0
    %647 = vmatprep.subr.bf16.mxu0 0
    %648 = vmatpush1.bf16.msra.mxu0 0
    %649 = vmatprep.subr.bf16.mxu0 0
    %650 = vmatpush1.bf16.msra.mxu0 0
    %651 = vmatprep.subr.bf16.mxu0 0
    %652 = vmatpush1.bf16.msra.mxu0 0
    %653 = vmatprep.subr.bf16.mxu0 0
    %654 = vmatpush1.bf16.msra.mxu0 0
    %655 = vmatprep.subr.bf16.mxu0 0
    %656 = vmatpush1.bf16.msra.mxu0 0
    %657 = vmatprep.subr.bf16.mxu0 0
    %658 = vmatpush1.bf16.msra.mxu0 0
    %659 = vmatprep.mubr.bf16.mxu0 0
    %660 = vmatmul.mubr.bf16.gmra.mrb[0].mxu0 %v626
    %v661 = vpop.f32.mrb[0].mxu0
    %v662 = vadd.f32 0.0, %v661
    %v663 = vpop.f32.mrb[0].mxu0
    %v664 = vadd.f32 0.0, %v663
    %v665 = vpop.f32.mrb[0].mxu0
    %v666 = vpop.f32.mrb[0].mxu0
    %667 = vdwg.mxu0
    %668 = vmatprep.subr.bf16.mxu0 0
    %669 = vmatpush1.bf16.msra.mxu0 %v233
    %670 = vmatprep.subr.bf16.mxu0 0
    %671 = vmatpush1.bf16.msra.mxu0 %v236
    %672 = vmatprep.subr.bf16.mxu0 0
    %673 = vmatpush1.bf16.msra.mxu0 %v239
    %674 = vmatprep.subr.bf16.mxu0 0
    %675 = vmatpush1.bf16.msra.mxu0 %v242
    %676 = vmatprep.subr.bf16.mxu0 0
    %677 = vmatpush1.bf16.msra.mxu0 %v245
    %678 = vmatprep.subr.bf16.mxu0 0
    %679 = vmatpush1.bf16.msra.mxu0 %v248
    %680 = vmatprep.subr.bf16.mxu0 0
    %681 = vmatpush1.bf16.msra.mxu0 %v251
    %682 = vmatprep.subr.bf16.mxu0 0
    %683 = vmatpush1.bf16.msra.mxu0 %v254
    %684 = vmatprep.subr.bf16.mxu0 0
    %685 = vmatpush1.bf16.msra.mxu0 0
    %686 = vmatprep.subr.bf16.mxu0 0
    %687 = vmatpush1.bf16.msra.mxu0 0
    %688 = vmatprep.subr.bf16.mxu0 0
    %689 = vmatpush1.bf16.msra.mxu0 0
    %690 = vmatprep.subr.bf16.mxu0 0
    %691 = vmatpush1.bf16.msra.mxu0 0
    %692 = vmatprep.subr.bf16.mxu0 0
    %693 = vmatpush1.bf16.msra.mxu0 0
    %694 = vmatprep.subr.bf16.mxu0 0
    %695 = vmatpush1.bf16.msra.mxu0 0
    %696 = vmatprep.subr.bf16.mxu0 0
    %697 = vmatpush1.bf16.msra.mxu0 0
    %698 = vmatprep.subr.bf16.mxu0 0
    %699 = vmatpush1.bf16.msra.mxu0 0
    %700 = vmatprep.mubr.bf16.mxu0 0
    %701 = vmatmul.mubr.bf16.gmra.mrb[0].mxu0 %v626
    %v702 = vpop.f32.mrb[0].mxu0
    %v703 = vadd.f32 0.0, %v702
    %v704 = vpop.f32.mrb[0].mxu0
    %v705 = vpop.f32.mrb[0].mxu0
    %v706 = vpop.f32.mrb[0].mxu0
    %707 = vdwg.mxu0
    %v708 = vadd.f32 %v623, %v662
    %v709 = vxor.u32 %v708, 2147483648
    %v710 = vmul.f32 %v709, 1.442695
    %v711 = vpow.pop %v710
    %v712 = vadd.f32 %v711, 1.0
    %v713 = vrcp.pop %v712
    %v714 = vmul.f32 1.0, %v713
    %v715 = vadd.f32 %v624, %v664
    %v716 = vxor.u32 %v715, 2147483648
    %v717 = vmul.f32 %v716, 1.442695
    %v718 = vpow.pop %v717
    %v719 = vadd.f32 %v718, 1.0
    %v720 = vrcp.pop %v719
    %v721 = vmul.f32 1.0, %v720
    %v722 = vadd.f32 %v703, %v110
    %v723 = vmul.f32 %v714, %v722
    %v724 = vadd.f32 %v625, %v723
    %v725 = vtanh.pop %v724
    %v726 = vsub.f32 %v619, %v725
    %v727 = vmul.f32 %v721, %v726
    %v728 = vadd.f32 %v725, %v727
    %vm729 = vcmp.gt.s32.totalorder %v112, 3
    %v730 = vsel %vm729, 1, 0
    %731 = vset.pattern.permute.xlu0 0
    %732 = vperm.xlu0 %731, %v730
    %v733 = vpop.permute.xlu0 %732
    %vm734 = vcmp.eq.s32.totalorder %v733, 1
    %v735 = vsel %vm734, %v728, %v619
    %s736 = smul.u32 4, 3
    %s737 = smul.addr %s736, 8
    %s738 = scalar_lea.vmem [#allocation2], %s737
    %v739 = vld [vmem:[%s738] sm:$0xff]
    %v740 = vld [vmem:[%s738 + $0x8] sm:$0xff]
    %v741 = vld [vmem:[%s738 + $0x10] sm:$0xff]
    %v742 = vpack.c.bf16 %v735, %v735
    %743 = vmatprep.subr.bf16.mxu0 %v232
    %744 = vmatpush1.bf16.msra.mxu0 %v231
    %745 = vmatprep.subr.bf16.mxu0 %v235
    %746 = vmatpush1.bf16.msra.mxu0 %v234
    %747 = vmatprep.subr.bf16.mxu0 %v238
    %748 = vmatpush1.bf16.msra.mxu0 %v237
    %749 = vmatprep.subr.bf16.mxu0 %v241
    %750 = vmatpush1.bf16.msra.mxu0 %v240
    %751 = vmatprep.subr.bf16.mxu0 %v244
    %752 = vmatpush1.bf16.msra.mxu0 %v243
    %753 = vmatprep.subr.bf16.mxu0 %v247
    %754 = vmatpush1.bf16.msra.mxu0 %v246
    %755 = vmatprep.subr.bf16.mxu0 %v250
    %756 = vmatpush1.bf16.msra.mxu0 %v249
    %757 = vmatprep.subr.bf16.mxu0 %v253
    %758 = vmatpush1.bf16.msra.mxu0 %v252
    %759 = vmatprep.subr.bf16.mxu0 0
    %760 = vmatpush1.bf16.msra.mxu0 0
    %761 = vmatprep.subr.bf16.mxu0 0
    %762 = vmatpush1.bf16.msra.mxu0 0
    %763 = vmatprep.subr.bf16.mxu0 0
    %764 = vmatpush1.bf16.msra.mxu0 0
    %765 = vmatprep.subr.bf16.mxu0 0
    %766 = vmatpush1.bf16.msra.mxu0 0
    %767 = vmatprep.subr.bf16.mxu0 0
    %768 = vmatpush1.bf16.msra.mxu0 0
    %769 = vmatprep.subr.bf16.mxu0 0
    %770 = vmatpush1.bf16.msra.mxu0 0
    %771 = vmatprep.subr.bf16.mxu0 0
    %772 = vmatpush1.bf16.msra.mxu0 0
    %773 = vmatprep.subr.bf16.mxu0 0
    %774 = vmatpush1.bf16.msra.mxu0 0
    %775 = vmatprep.mubr.bf16.mxu0 0
    %776 = vmatmul.mubr.bf16.gmra.mrb[0].mxu0 %v742
    %v777 = vpop.f32.mrb[0].mxu0
    %v778 = vadd.f32 0.0, %v777
    %v779 = vpop.f32.mrb[0].mxu0
    %v780 = vadd.f32 0.0, %v779
    %v781 = vpop.f32.mrb[0].mxu0
    %v782 = vpop.f32.mrb[0].mxu0
    %783 = vdwg.mxu0
    %784 = vmatprep.subr.bf16.mxu0 0
    %785 = vmatpush1.bf16.msra.mxu0 %v233
    %786 = vmatprep.subr.bf16.mxu0 0
    %787 = vmatpush1.bf16.msra.mxu0 %v236
    %788 = vmatprep.subr.bf16.mxu0 0
    %789 = vmatpush1.bf16.msra.mxu0 %v239
    %790 = vmatprep.subr.bf16.mxu0 0
    %791 = vmatpush1.bf16.msra.mxu0 %v242
    %792 = vmatprep.subr.bf16.mxu0 0
    %793 = vmatpush1.bf16.msra.mxu0 %v245
    %794 = vmatprep.subr.bf16.mxu0 0
    %795 = vmatpush1.bf16.msra.mxu0 %v248
    %796 = vmatprep.subr.bf16.mxu0 0
    %797 = vmatpush1.bf16.msra.mxu0 %v251
    %798 = vmatprep.subr.bf16.mxu0 0
    %799 = vmatpush1.bf16.msra.mxu0 %v254
    %800 = vmatprep.subr.bf16.mxu0 0
    %801 = vmatpush1.bf16.msra.mxu0 0
    %802 = vmatprep.subr.bf16.mxu0 0
    %803 = vmatpush1.bf16.msra.mxu0 0
    %804 = vmatprep.subr.bf16.mxu0 0
    %805 = vmatpush1.bf16.msra.mxu0 0
    %806 = vmatprep.subr.bf16.mxu0 0
    %807 = vmatpush1.bf16.msra.mxu0 0
    %808 = vmatprep.subr.bf16.mxu0 0
    %809 = vmatpush1.bf16.msra.mxu0 0
    %810 = vmatprep.subr.bf16.mxu0 0
    %811 = vmatpush1.bf16.msra.mxu0 0
    %812 = vmatprep.subr.bf16.mxu0 0
    %813 = vmatpush1.bf16.msra.mxu0 0
    %814 = vmatprep.subr.bf16.mxu0 0
    %815 = vmatpush1.bf16.msra.mxu0 0
    %816 = vmatprep.mubr.bf16.mxu0 0
    %817 = vmatmul.mubr.bf16.gmra.mrb[0].mxu0 %v742
    %v818 = vpop.f32.mrb[0].mxu0
    %v819 = vadd.f32 0.0, %v818
    %v820 = vpop.f32.mrb[0].mxu0
    %v821 = vpop.f32.mrb[0].mxu0
    %v822 = vpop.f32.mrb[0].mxu0
    %823 = vdwg.mxu0
    %v824 = vadd.f32 %v739, %v778
    %v825 = vxor.u32 %v824, 2147483648
    %v826 = vmul.f32 %v825, 1.442695
    %v827 = vpow.pop %v826
    %v828 = vadd.f32 %v827, 1.0
    %v829 = vrcp.pop %v828
    %v830 = vmul.f32 1.0, %v829
    %v831 = vadd.f32 %v740, %v780
    %v832 = vxor.u32 %v831, 2147483648
    %v833 = vmul.f32 %v832, 1.442695
    %v834 = vpow.pop %v833
    %v835 = vadd.f32 %v834, 1.0
    %v836 = vrcp.pop %v835
    %v837 = vmul.f32 1.0, %v836
    %v838 = vadd.f32 %v819, %v110
    %v839 = vmul.f32 %v830, %v838
    %v840 = vadd.f32 %v741, %v839
    %v841 = vtanh.pop %v840
    %v842 = vsub.f32 %v735, %v841
    %v843 = vmul.f32 %v837, %v842
    %v844 = vadd.f32 %v841, %v843
    %vm845 = vcmp.gt.s32.totalorder %v112, 4
    %v846 = vsel %vm845, 1, 0
    %847 = vset.pattern.permute.xlu0 0
    %848 = vperm.xlu0 %847, %v846
    %v849 = vpop.permute.xlu0 %848
    %vm850 = vcmp.eq.s32.totalorder %v849, 1
    %v851 = vsel %vm850, %v844, %v735
    %s852 = smul.u32 5, 3
    %s853 = smul.addr %s852, 8
    %s854 = scalar_lea.vmem [#allocation2], %s853
    %v855 = vld [vmem:[%s854] sm:$0xff]
    %v856 = vld [vmem:[%s854 + $0x8] sm:$0xff]
    %v857 = vld [vmem:[%s854 + $0x10] sm:$0xff]
    %v858 = vpack.c.bf16 %v851, %v851
    %859 = vmatprep.subr.bf16.mxu0 %v232
    %860 = vmatpush1.bf16.msra.mxu0 %v231
    %861 = vmatprep.subr.bf16.mxu0 %v235
    %862 = vmatpush1.bf16.msra.mxu0 %v234
    %863 = vmatprep.subr.bf16.mxu0 %v238
    %864 = vmatpush1.bf16.msra.mxu0 %v237
    %865 = vmatprep.subr.bf16.mxu0 %v241
    %866 = vmatpush1.bf16.msra.mxu0 %v240
    %867 = vmatprep.subr.bf16.mxu0 %v244
    %868 = vmatpush1.bf16.msra.mxu0 %v243
    %869 = vmatprep.subr.bf16.mxu0 %v247
    %870 = vmatpush1.bf16.msra.mxu0 %v246
    %871 = vmatprep.subr.bf16.mxu0 %v250
    %872 = vmatpush1.bf16.msra.mxu0 %v249
    %873 = vmatprep.subr.bf16.mxu0 %v253
    %874 = vmatpush1.bf16.msra.mxu0 %v252
    %875 = vmatprep.subr.bf16.mxu0 0
    %876 = vmatpush1.bf16.msra.mxu0 0
    %877 = vmatprep.subr.bf16.mxu0 0
    %878 = vmatpush1.bf16.msra.mxu0 0
    %879 = vmatprep.subr.bf16.mxu0 0
    %880 = vmatpush1.bf16.msra.mxu0 0
    %881 = vmatprep.subr.bf16.mxu0 0
    %882 = vmatpush1.bf16.msra.mxu0 0
    %883 = vmatprep.subr.bf16.mxu0 0
    %884 = vmatpush1.bf16.msra.mxu0 0
    %885 = vmatprep.subr.bf16.mxu0 0
    %886 = vmatpush1.bf16.msra.mxu0 0
    %887 = vmatprep.subr.bf16.mxu0 0
    %888 = vmatpush1.bf16.msra.mxu0 0
    %889 = vmatprep.subr.bf16.mxu0 0
    %890 = vmatpush1.bf16.msra.mxu0 0
    %891 = vmatprep.mubr.bf16.mxu0 0
    %892 = vmatmul.mubr.bf16.gmra.mrb[0].mxu0 %v858
    %v893 = vpop.f32.mrb[0].mxu0
    %v894 = vadd.f32 0.0, %v893
    %v895 = vpop.f32.mrb[0].mxu0
    %v896 = vadd.f32 0.0, %v895
    %v897 = vpop.f32.mrb[0].mxu0
    %v898 = vpop.f32.mrb[0].mxu0
    %899 = vdwg.mxu0
    %900 = vmatprep.subr.bf16.mxu0 0
    %901 = vmatpush1.bf16.msra.mxu0 %v233
    %902 = vmatprep.subr.bf16.mxu0 0
    %903 = vmatpush1.bf16.msra.mxu0 %v236
    %904 = vmatprep.subr.bf16.mxu0 0
    %905 = vmatpush1.bf16.msra.mxu0 %v239
    %906 = vmatprep.subr.bf16.mxu0 0
    %907 = vmatpush1.bf16.msra.mxu0 %v242
    %908 = vmatprep.subr.bf16.mxu0 0
    %909 = vmatpush1.bf16.msra.mxu0 %v245
    %910 = vmatprep.subr.bf16.mxu0 0
    %911 = vmatpush1.bf16.msra.mxu0 %v248
    %912 = vmatprep.subr.bf16.mxu0 0
    %913 = vmatpush1.bf16.msra.mxu0 %v251
    %914 = vmatprep.subr.bf16.mxu0 0
    %915 = vmatpush1.bf16.msra.mxu0 %v254
    %916 = vmatprep.subr.bf16.mxu0 0
    %917 = vmatpush1.bf16.msra.mxu0 0
    %918 = vmatprep.subr.bf16.mxu0 0
    %919 = vmatpush1.bf16.msra.mxu0 0
    %920 = vmatprep.subr.bf16.mxu0 0
    %921 = vmatpush1.bf16.msra.mxu0 0
    %922 = vmatprep.subr.bf16.mxu0 0
    %923 = vmatpush1.bf16.msra.mxu0 0
    %924 = vmatprep.subr.bf16.mxu0 0
    %925 = vmatpush1.bf16.msra.mxu0 0
    %926 = vmatprep.subr.bf16.mxu0 0
    %927 = vmatpush1.bf16.msra.mxu0 0
    %928 = vmatprep.subr.bf16.mxu0 0
    %929 = vmatpush1.bf16.msra.mxu0 0
    %930 = vmatprep.subr.bf16.mxu0 0
    %931 = vmatpush1.bf16.msra.mxu0 0
    %932 = vmatprep.mubr.bf16.mxu0 0
    %933 = vmatmul.mubr.bf16.gmra.mrb[0].mxu0 %v858
    %v934 = vpop.f32.mrb[0].mxu0
    %v935 = vadd.f32 0.0, %v934
    %v936 = vpop.f32.mrb[0].mxu0
    %v937 = vpop.f32.mrb[0].mxu0
    %v938 = vpop.f32.mrb[0].mxu0
    %939 = vdwg.mxu0
    %v940 = vadd.f32 %v855, %v894
    %v941 = vxor.u32 %v940, 2147483648
    %v942 = vmul.f32 %v941, 1.442695
    %v943 = vpow.pop %v942
    %v944 = vadd.f32 %v943, 1.0
    %v945 = vrcp.pop %v944
    %v946 = vmul.f32 1.0, %v945
    %v947 = vadd.f32 %v856, %v896
    %v948 = vxor.u32 %v947, 2147483648
    %v949 = vmul.f32 %v948, 1.442695
    %v950 = vpow.pop %v949
    %v951 = vadd.f32 %v950, 1.0
    %v952 = vrcp.pop %v951
    %v953 = vmul.f32 1.0, %v952
    %v954 = vadd.f32 %v935, %v110
    %v955 = vmul.f32 %v946, %v954
    %v956 = vadd.f32 %v857, %v955
    %v957 = vtanh.pop %v956
    %v958 = vsub.f32 %v851, %v957
    %v959 = vmul.f32 %v953, %v958
    %v960 = vadd.f32 %v957, %v959
    %vm961 = vcmp.gt.s32.totalorder %v112, 5
    %v962 = vsel %vm961, 1, 0
    %963 = vset.pattern.permute.xlu0 0
    %964 = vperm.xlu0 %963, %v962
    %v965 = vpop.permute.xlu0 %964
    %vm966 = vcmp.eq.s32.totalorder %v965, 1
    %v967 = vsel %vm966, %v960, %v851
    %s968 = smul.u32 6, 3
    %s969 = smul.addr %s968, 8
    %s970 = scalar_lea.vmem [#allocation2], %s969
    %v971 = vld [vmem:[%s970] sm:$0xff]
    %v972 = vld [vmem:[%s970 + $0x8] sm:$0xff]
    %v973 = vld [vmem:[%s970 + $0x10] sm:$0xff]
    %v974 = vpack.c.bf16 %v967, %v967
    %975 = vmatprep.subr.bf16.mxu0 %v232
    %976 = vmatpush1.bf16.msra.mxu0 %v231
    %977 = vmatprep.subr.bf16.mxu0 %v235
    %978 = vmatpush1.bf16.msra.mxu0 %v234
    %979 = vmatprep.subr.bf16.mxu0 %v238
    %980 = vmatpush1.bf16.msra.mxu0 %v237
    %981 = vmatprep.subr.bf16.mxu0 %v241
    %982 = vmatpush1.bf16.msra.mxu0 %v240
    %983 = vmatprep.subr.bf16.mxu0 %v244
    %984 = vmatpush1.bf16.msra.mxu0 %v243
    %985 = vmatprep.subr.bf16.mxu0 %v247
    %986 = vmatpush1.bf16.msra.mxu0 %v246
    %987 = vmatprep.subr.bf16.mxu0 %v250
    %988 = vmatpush1.bf16.msra.mxu0 %v249
    %989 = vmatprep.subr.bf16.mxu0 %v253
    %990 = vmatpush1.bf16.msra.mxu0 %v252
    %991 = vmatprep.subr.bf16.mxu0 0
    %992 = vmatpush1.bf16.msra.mxu0 0
    %993 = vmatprep.subr.bf16.mxu0 0
    %994 = vmatpush1.bf16.msra.mxu0 0
    %995 = vmatprep.subr.bf16.mxu0 0
    %996 = vmatpush1.bf16.msra.mxu0 0
    %997 = vmatprep.subr.bf16.mxu0 0
    %998 = vmatpush1.bf16.msra.mxu0 0
    %999 = vmatprep.subr.bf16.mxu0 0
    %1000 = vmatpush1.bf16.msra.mxu0 0
    %1001 = vmatprep.subr.bf16.mxu0 0
    %1002 = vmatpush1.bf16.msra.mxu0 0
    %1003 = vmatprep.subr.bf16.mxu0 0
    %1004 = vmatpush1.bf16.msra.mxu0 0
    %1005 = vmatprep.subr.bf16.mxu0 0
    %1006 = vmatpush1.bf16.msra.mxu0 0
    %1007 = vmatprep.mubr.bf16.mxu0 0
    %1008 = vmatmul.mubr.bf16.gmra.mrb[0].mxu0 %v974
    %v1009 = vpop.f32.mrb[0].mxu0
    %v1010 = vadd.f32 0.0, %v1009
    %v1011 = vpop.f32.mrb[0].mxu0
    %v1012 = vadd.f32 0.0, %v1011
    %v1013 = vpop.f32.mrb[0].mxu0
    %v1014 = vpop.f32.mrb[0].mxu0
    %1015 = vdwg.mxu0
    %1016 = vmatprep.subr.bf16.mxu0 0
    %1017 = vmatpush1.bf16.msra.mxu0 %v233
    %1018 = vmatprep.subr.bf16.mxu0 0
    %1019 = vmatpush1.bf16.msra.mxu0 %v236
    %1020 = vmatprep.subr.bf16.mxu0 0
    %1021 = vmatpush1.bf16.msra.mxu0 %v239
    %1022 = vmatprep.subr.bf16.mxu0 0
    %1023 = vmatpush1.bf16.msra.mxu0 %v242
    %1024 = vmatprep.subr.bf16.mxu0 0
    %1025 = vmatpush1.bf16.msra.mxu0 %v245
    %1026 = vmatprep.subr.bf16.mxu0 0
    %1027 = vmatpush1.bf16.msra.mxu0 %v248
    %1028 = vmatprep.subr.bf16.mxu0 0
    %1029 = vmatpush1.bf16.msra.mxu0 %v251
    %1030 = vmatprep.subr.bf16.mxu0 0
    %1031 = vmatpush1.bf16.msra.mxu0 %v254
    %1032 = vmatprep.subr.bf16.mxu0 0
    %1033 = vmatpush1.bf16.msra.mxu0 0
    %1034 = vmatprep.subr.bf16.mxu0 0
    %1035 = vmatpush1.bf16.msra.mxu0 0
    %1036 = vmatprep.subr.bf16.mxu0 0
    %1037 = vmatpush1.bf16.msra.mxu0 0
    %1038 = vmatprep.subr.bf16.mxu0 0
    %1039 = vmatpush1.bf16.msra.mxu0 0
    %1040 = vmatprep.subr.bf16.mxu0 0
    %1041 = vmatpush1.bf16.msra.mxu0 0
    %1042 = vmatprep.subr.bf16.mxu0 0
    %1043 = vmatpush1.bf16.msra.mxu0 0
    %1044 = vmatprep.subr.bf16.mxu0 0
    %1045 = vmatpush1.bf16.msra.mxu0 0
    %1046 = vmatprep.subr.bf16.mxu0 0
    %1047 = vmatpush1.bf16.msra.mxu0 0
    %1048 = vmatprep.mubr.bf16.mxu0 0
    %1049 = vmatmul.mubr.bf16.gmra.mrb[0].mxu0 %v974
    %v1050 = vpop.f32.mrb[0].mxu0
    %v1051 = vadd.f32 0.0, %v1050
    %v1052 = vpop.f32.mrb[0].mxu0
    %v1053 = vpop.f32.mrb[0].mxu0
    %v1054 = vpop.f32.mrb[0].mxu0
    %1055 = vdwg.mxu0
    %v1056 = vadd.f32 %v971, %v1010
    %v1057 = vxor.u32 %v1056, 2147483648
    %v1058 = vmul.f32 %v1057, 1.442695
    %v1059 = vpow.pop %v1058
    %v1060 = vadd.f32 %v1059, 1.0
    %v1061 = vrcp.pop %v1060
    %v1062 = vmul.f32 1.0, %v1061
    %v1063 = vadd.f32 %v972, %v1012
    %v1064 = vxor.u32 %v1063, 2147483648
    %v1065 = vmul.f32 %v1064, 1.442695
    %v1066 = vpow.pop %v1065
    %v1067 = vadd.f32 %v1066, 1.0
    %v1068 = vrcp.pop %v1067
    %v1069 = vmul.f32 1.0, %v1068
    %v1070 = vadd.f32 %v1051, %v110
    %v1071 = vmul.f32 %v1062, %v1070
    %v1072 = vadd.f32 %v973, %v1071
    %v1073 = vtanh.pop %v1072
    %v1074 = vsub.f32 %v967, %v1073
    %v1075 = vmul.f32 %v1069, %v1074
    %v1076 = vadd.f32 %v1073, %v1075
    %vm1077 = vcmp.gt.s32.totalorder %v112, 6
    %v1078 = vsel %vm1077, 1, 0
    %1079 = vset.pattern.permute.xlu0 0
    %1080 = vperm.xlu0 %1079, %v1078
    %v1081 = vpop.permute.xlu0 %1080
    %vm1082 = vcmp.eq.s32.totalorder %v1081, 1
    %v1083 = vsel %vm1082, %v1076, %v967
    %s1084 = smul.u32 7, 3
    %s1085 = smul.addr %s1084, 8
    %s1086 = scalar_lea.vmem [#allocation2], %s1085
    %v1087 = vld [vmem:[%s1086] sm:$0xff]
    %v1088 = vld [vmem:[%s1086 + $0x8] sm:$0xff]
    %v1089 = vld [vmem:[%s1086 + $0x10] sm:$0xff]
    %v1090 = vpack.c.bf16 %v1083, %v1083
    %1091 = vmatprep.subr.bf16.mxu0 %v232
    %1092 = vmatpush1.bf16.msra.mxu0 %v231
    %1093 = vmatprep.subr.bf16.mxu0 %v235
    %1094 = vmatpush1.bf16.msra.mxu0 %v234
    %1095 = vmatprep.subr.bf16.mxu0 %v238
    %1096 = vmatpush1.bf16.msra.mxu0 %v237
    %1097 = vmatprep.subr.bf16.mxu0 %v241
    %1098 = vmatpush1.bf16.msra.mxu0 %v240
    %1099 = vmatprep.subr.bf16.mxu0 %v244
    %1100 = vmatpush1.bf16.msra.mxu0 %v243
    %1101 = vmatprep.subr.bf16.mxu0 %v247
    %1102 = vmatpush1.bf16.msra.mxu0 %v246
    %1103 = vmatprep.subr.bf16.mxu0 %v250
    %1104 = vmatpush1.bf16.msra.mxu0 %v249
    %1105 = vmatprep.subr.bf16.mxu0 %v253
    %1106 = vmatpush1.bf16.msra.mxu0 %v252
    %1107 = vmatprep.subr.bf16.mxu0 0
    %1108 = vmatpush1.bf16.msra.mxu0 0
    %1109 = vmatprep.subr.bf16.mxu0 0
    %1110 = vmatpush1.bf16.msra.mxu0 0
    %1111 = vmatprep.subr.bf16.mxu0 0
    %1112 = vmatpush1.bf16.msra.mxu0 0
    %1113 = vmatprep.subr.bf16.mxu0 0
    %1114 = vmatpush1.bf16.msra.mxu0 0
    %1115 = vmatprep.subr.bf16.mxu0 0
    %1116 = vmatpush1.bf16.msra.mxu0 0
    %1117 = vmatprep.subr.bf16.mxu0 0
    %1118 = vmatpush1.bf16.msra.mxu0 0
    %1119 = vmatprep.subr.bf16.mxu0 0
    %1120 = vmatpush1.bf16.msra.mxu0 0
    %1121 = vmatprep.subr.bf16.mxu0 0
    %1122 = vmatpush1.bf16.msra.mxu0 0
    %1123 = vmatprep.mubr.bf16.mxu0 0
    %1124 = vmatmul.mubr.bf16.gmra.mrb[0].mxu0 %v1090
    %v1125 = vpop.f32.mrb[0].mxu0
    %v1126 = vadd.f32 0.0, %v1125
    %v1127 = vpop.f32.mrb[0].mxu0
    %v1128 = vadd.f32 0.0, %v1127
    %v1129 = vpop.f32.mrb[0].mxu0
    %v1130 = vpop.f32.mrb[0].mxu0
    %1131 = vdwg.mxu0
    %1132 = vmatprep.subr.bf16.mxu0 0
    %1133 = vmatpush1.bf16.msra.mxu0 %v233
    %1134 = vmatprep.subr.bf16.mxu0 0
    %1135 = vmatpush1.bf16.msra.mxu0 %v236
    %1136 = vmatprep.subr.bf16.mxu0 0
    %1137 = vmatpush1.bf16.msra.mxu0 %v239
    %1138 = vmatprep.subr.bf16.mxu0 0
    %1139 = vmatpush1.bf16.msra.mxu0 %v242
    %1140 = vmatprep.subr.bf16.mxu0 0
    %1141 = vmatpush1.bf16.msra.mxu0 %v245
    %1142 = vmatprep.subr.bf16.mxu0 0
    %1143 = vmatpush1.bf16.msra.mxu0 %v248
    %1144 = vmatprep.subr.bf16.mxu0 0
    %1145 = vmatpush1.bf16.msra.mxu0 %v251
    %1146 = vmatprep.subr.bf16.mxu0 0
    %1147 = vmatpush1.bf16.msra.mxu0 %v254
    %1148 = vmatprep.subr.bf16.mxu0 0
    %1149 = vmatpush1.bf16.msra.mxu0 0
    %1150 = vmatprep.subr.bf16.mxu0 0
    %1151 = vmatpush1.bf16.msra.mxu0 0
    %1152 = vmatprep.subr.bf16.mxu0 0
    %1153 = vmatpush1.bf16.msra.mxu0 0
    %1154 = vmatprep.subr.bf16.mxu0 0
    %1155 = vmatpush1.bf16.msra.mxu0 0
    %1156 = vmatprep.subr.bf16.mxu0 0
    %1157 = vmatpush1.bf16.msra.mxu0 0
    %1158 = vmatprep.subr.bf16.mxu0 0
    %1159 = vmatpush1.bf16.msra.mxu0 0
    %1160 = vmatprep.subr.bf16.mxu0 0
    %1161 = vmatpush1.bf16.msra.mxu0 0
    %1162 = vmatprep.subr.bf16.mxu0 0
    %1163 = vmatpush1.bf16.msra.mxu0 0
    %1164 = vmatprep.mubr.bf16.mxu0 0
    %1165 = vmatmul.mubr.bf16.gmra.mrb[0].mxu0 %v1090
    %v1166 = vpop.f32.mrb[0].mxu0
    %v1167 = vadd.f32 0.0, %v1166
    %v1168 = vpop.f32.mrb[0].mxu0
    %v1169 = vpop.f32.mrb[0].mxu0
    %v1170 = vpop.f32.mrb[0].mxu0
    %1171 = vdwg.mxu0
    %v1172 = vadd.f32 %v1087, %v1126
    %v1173 = vxor.u32 %v1172, 2147483648
    %v1174 = vmul.f32 %v1173, 1.442695
    %v1175 = vpow.pop %v1174
    %v1176 = vadd.f32 %v1175, 1.0
    %v1177 = vrcp.pop %v1176
    %v1178 = vmul.f32 1.0, %v1177
    %v1179 = vadd.f32 %v1088, %v1128
    %v1180 = vxor.u32 %v1179, 2147483648
    %v1181 = vmul.f32 %v1180, 1.442695
    %v1182 = vpow.pop %v1181
    %v1183 = vadd.f32 %v1182, 1.0
    %v1184 = vrcp.pop %v1183
    %v1185 = vmul.f32 1.0, %v1184
    %v1186 = vadd.f32 %v1167, %v110
    %v1187 = vmul.f32 %v1178, %v1186
    %v1188 = vadd.f32 %v1089, %v1187
    %v1189 = vtanh.pop %v1188
    %v1190 = vsub.f32 %v1083, %v1189
    %v1191 = vmul.f32 %v1185, %v1190
    %v1192 = vadd.f32 %v1189, %v1191
    %vm1193 = vcmp.gt.s32.totalorder %v112, 7
    %v1194 = vsel %vm1193, 1, 0
    %1195 = vset.pattern.permute.xlu0 0
    %1196 = vperm.xlu0 %1195, %v1194
    %v1197 = vpop.permute.xlu0 %1196
    %vm1198 = vcmp.eq.s32.totalorder %v1197, 1
    %v1199 = vsel %vm1198, %v1192, %v1083
    %v1200 = vpack.c.bf16 %v1199, %v1199
    %v1201 = vld [vmem:[#allocation10] sm:$0xf]
    %v1202 = vld [vmem:[#allocation10 + $0x4] sm:$0xf]
    %v1203 = vld [vmem:[#allocation10 + $0x8] sm:$0xf]
    %v1204 = vld [vmem:[#allocation10 + $0xc] sm:$0xf]
    %v1205 = vld [vmem:[#allocation10 + $0x10] sm:$0xf]
    %v1206 = vld [vmem:[#allocation10 + $0x14] sm:$0xf]
    %v1207 = vld [vmem:[#allocation10 + $0x18] sm:$0xf]
    %v1208 = vld [vmem:[#allocation10 + $0x1c] sm:$0xf]
    %v1209 = vld [vmem:[#allocation10 + $0x20] sm:$0xf]
    %v1210 = vld [vmem:[#allocation10 + $0x24] sm:$0xf]
    %v1211 = vld [vmem:[#allocation10 + $0x28] sm:$0xf]
    %v1212 = vld [vmem:[#allocation10 + $0x2c] sm:$0xf]
    %v1213 = vld [vmem:[#allocation10 + $0x30] sm:$0xf]
    %v1214 = vld [vmem:[#allocation10 + $0x34] sm:$0xf]
    %v1215 = vld [vmem:[#allocation10 + $0x38] sm:$0xf]
    %v1216 = vld [vmem:[#allocation10 + $0x3c] sm:$0xf]
    %v1217 = vld [vmem:[%s6] sm:$0x1]
    %v1219 = vlaneseq
    %v1220 = vshrl.u32 %v1219, 7
    %v1221 = vsub.s32 0, %v1220
    %v1222 = vrot.slane %v1217, %v1221
    %v1240 = vunpack.c.l.b16 %v1201
    %v1241 = vunpack.c.l.b16 %v1202
    %v1242 = vunpack.c.l.b16 %v1203
    %v1243 = vunpack.c.l.b16 %v1204
    %v1244 = vunpack.c.l.b16 %v1205
    %v1245 = vunpack.c.l.b16 %v1206
    %v1246 = vunpack.c.l.b16 %v1207
    %v1247 = vunpack.c.l.b16 %v1208
    %v1248 = vunpack.c.l.b16 %v1209
    %v1249 = vunpack.c.l.b16 %v1210
    %v1250 = vunpack.c.l.b16 %v1211
    %v1251 = vunpack.c.l.b16 %v1212
    %v1252 = vunpack.c.l.b16 %v1213
    %v1253 = vunpack.c.l.b16 %v1214
    %v1254 = vunpack.c.l.b16 %v1215
    %v1255 = vunpack.c.l.b16 %v1216
    %v1256 = vpack.c.b16 %v1241, %v1240
    %v1257 = vpack.c.b16 %v1243, %v1242
    %v1258 = vpack.c.b16 %v1245, %v1244
    %v1259 = vpack.c.b16 %v1247, %v1246
    %v1260 = vpack.c.b16 %v1249, %v1248
    %v1261 = vpack.c.b16 %v1251, %v1250
    %v1262 = vpack.c.b16 %v1253, %v1252
    %v1263 = vpack.c.b16 %v1255, %v1254
    %1272 = vmatprep.subr.bf16.mxu0 0
    %1273 = vmatpush1.bf16.msra.mxu0 %v1256
    %1274 = vmatprep.subr.bf16.mxu0 0
    %1275 = vmatpush1.bf16.msra.mxu0 %v1257
    %1276 = vmatprep.subr.bf16.mxu0 0
    %1277 = vmatpush1.bf16.msra.mxu0 %v1258
    %1278 = vmatprep.subr.bf16.mxu0 0
    %1279 = vmatpush1.bf16.msra.mxu0 %v1259
    %1280 = vmatprep.subr.bf16.mxu0 0
    %1281 = vmatpush1.bf16.msra.mxu0 %v1260
    %1282 = vmatprep.subr.bf16.mxu0 0
    %1283 = vmatpush1.bf16.msra.mxu0 %v1261
    %1284 = vmatprep.subr.bf16.mxu0 0
    %1285 = vmatpush1.bf16.msra.mxu0 %v1262
    %1286 = vmatprep.subr.bf16.mxu0 0
    %1287 = vmatpush1.bf16.msra.mxu0 %v1263
    %1288 = vmatprep.subr.bf16.mxu0 0
    %1289 = vmatpush1.bf16.msra.mxu0 0
    %1290 = vmatprep.subr.bf16.mxu0 0
    %1291 = vmatpush1.bf16.msra.mxu0 0
    %1292 = vmatprep.subr.bf16.mxu0 0
    %1293 = vmatpush1.bf16.msra.mxu0 0
    %1294 = vmatprep.subr.bf16.mxu0 0
    %1295 = vmatpush1.bf16.msra.mxu0 0
    %1296 = vmatprep.subr.bf16.mxu0 0
    %1297 = vmatpush1.bf16.msra.mxu0 0
    %1298 = vmatprep.subr.bf16.mxu0 0
    %1299 = vmatpush1.bf16.msra.mxu0 0
    %1300 = vmatprep.subr.bf16.mxu0 0
    %1301 = vmatpush1.bf16.msra.mxu0 0
    %1302 = vmatprep.subr.bf16.mxu0 0
    %1303 = vmatpush1.bf16.msra.mxu0 0
    %1304 = vmatprep.mubr.bf16.mxu0 0
    %1305 = vmatmul.mubr.bf16.gmra.mrb[0].mxu0 %v1200
    %v1306 = vpop.f32.mrb[0].mxu0
    %v1307 = vadd.f32 %v1222, %v1306
    %v1308 = vpop.f32.mrb[0].mxu0
    %v1309 = vpop.f32.mrb[0].mxu0
    %v1310 = vpop.f32.mrb[0].mxu0
    %1311 = vdwg.mxu0
    %1312 = vst [vmem:[#allocation11] sm:$0xff] %v1307
    // Predicated region
    $region45: #{tpu_custom_call.1} parent=1 // pred_check
      _
    $region46: #{tpu_custom_call.1} parent=1 // pred_check_branch
      %1314 = sbr.rel (0) target = $region48
    $region47: #{tpu_custom_call.1} parent=1 // pred_region
      %s1316 = ssub.s32 128, 128
      %1317 = vsyncadd [#allocation7], %s1316
      %s1319 = sshll.u32 [#allocation11], 4
      %s1320 = int_to_ptr.vmem [resolvable:$true] %s1319
      %1322 = dma.vmem_to_hbm [thread:$0]  %s1320, 128, %s7, [#allocation7]
    $region48: #{tpu_custom_call.1} parent=1 // pred_fallthru
      _
    // Predicated region
    $region49: #{tpu_custom_call.1} parent=1 // pred_check
      _
    $region50: #{tpu_custom_call.1} parent=1 // pred_check_branch
      %1324 = sbr.rel (0) target = $region52
    $region51: #{tpu_custom_call.1} parent=1 // pred_region
      %1325 = dma.done [#allocation7], 128
    $region52: #{tpu_custom_call.1} parent=1 // pred_fallthru
      _
    %1326 = vsyncpa [#allocation6], 1
    %1327 = vsyncpa [#allocation9], 1
    %1328 = vsyncpa [#allocation7], 1

</llo_original>
